<compile_context>
chip_gen: v7x
topology: tpu7x:2x2x1
jax: 0.10.0
libtpu: 0.0.40
codegen_flags: <defaults>
</compile_context>

<pallas_src>
import functools
import math

import jax
import jax.numpy as jnp
from jax.experimental import pallas as pl
from jax.experimental.pallas import tpu as pltpu


def _round_up(v, m):
    return ((v + m - 1) // m) * m


# ----------------------------------------------------------------------------
# Kernel 1: tiled patch-projection matmul  (im2col'd patches @ W_proj + b)
# ----------------------------------------------------------------------------
def _proj_matmul_kernel(col_ref, w_ref, b_ref, o_ref):
    # col_ref: (TM, K) bf16   w_ref: (K, Dp) bf16   b_ref: (1, Dp) f32
    # o_ref  : (TM, Dp) bf16
    acc = jnp.dot(col_ref[...], w_ref[...], preferred_element_type=jnp.float32)
    o_ref[...] = (acc + b_ref[...]).astype(o_ref.dtype)


def _proj_matmul_ln_kernel(col_ref, w_ref, b_ref, g_ref, bt_ref, o_ref, *, D, eps):
    # with_pos=False path: LayerNorm fused into the matmul epilogue (per-row LN),
    # so the feature map never round-trips HBM and kernel 2 is skipped entirely.
    acc = jnp.dot(col_ref[...], w_ref[...], preferred_element_type=jnp.float32)
    x = acc + b_ref[...]                         # (TM, Dp); padded lanes are exactly 0
    inv_d = 1.0 / D
    s1 = jnp.sum(x, axis=-1, keepdims=True)
    s2 = jnp.sum(x * x, axis=-1, keepdims=True)
    mean = s1 * inv_d
    var = s2 * inv_d - mean * mean               # E[x^2] - mean^2 (no lane mask needed)
    normed = (x - mean) * jax.lax.rsqrt(var + eps)
    out = normed * g_ref[...] + bt_ref[...]
    if out.shape[1] != D:
        out = out[:, :D]
    o_ref[...] = out.astype(o_ref.dtype)


def _pick_m_tile(M, tm=1024):
    """Large M-tiles for HBM efficiency, but >=2 grid steps when M allows (v7x megacore)."""
    if M <= 8:
        return M
    if M <= 2 * tm:
        return _round_up(pl.cdiv(M, 2), 8)       # always <= M here, >=2 tiles
    return tm


def proj_matmul(col, wmat, bias2d, *, tm=1024):
    """col: (M, K) bf16, wmat: (K, Dp) bf16, bias2d: (1, Dp) f32 -> (M, Dp) bf16."""
    M, K = col.shape
    _, Dp = wmat.shape
    TM = _pick_m_tile(M, tm)
    grid = (pl.cdiv(M, TM),)
    cost = pl.CostEstimate(
        flops=2 * M * K * Dp,
        transcendentals=0,
        bytes_accessed=M * K * 2 + K * Dp * 2 + Dp * 4 + M * Dp * 2,
    )
    return pl.pallas_call(
        _proj_matmul_kernel,
        out_shape=jax.ShapeDtypeStruct((M, Dp), jnp.bfloat16),
        grid=grid,
        in_specs=[
            pl.BlockSpec((TM, K), lambda i: (i, 0)),     # K full-extent (no lane pad)
            pl.BlockSpec((K, Dp), lambda i: (0, 0)),
            pl.BlockSpec((1, Dp), lambda i: (0, 0)),
        ],
        out_specs=pl.BlockSpec((TM, Dp), lambda i: (i, 0)),
        compiler_params=pltpu.CompilerParams(dimension_semantics=("parallel",)),
        cost_estimate=cost,
    )(col, wmat, bias2d)


def proj_matmul_ln(col, wmat, bias2d, gamma2d, beta2d, *, D, eps, tm=1024):
    """Matmul + fused LayerNorm epilogue; returns (M, D) f32 (unpadded)."""
    M, K = col.shape
    _, Dp = wmat.shape
    TM = _pick_m_tile(M, tm)
    grid = (pl.cdiv(M, TM),)
    kernel = functools.partial(_proj_matmul_ln_kernel, D=D, eps=eps)
    cost = pl.CostEstimate(
        flops=2 * M * K * Dp + 10 * M * Dp,
        transcendentals=M,
        bytes_accessed=M * K * 2 + K * Dp * 2 + 3 * Dp * 4 + M * D * 4,
    )
    return pl.pallas_call(
        kernel,
        out_shape=jax.ShapeDtypeStruct((M, D), jnp.float32),
        grid=grid,
        in_specs=[
            pl.BlockSpec((TM, K), lambda i: (i, 0)),
            pl.BlockSpec((K, Dp), lambda i: (0, 0)),
            pl.BlockSpec((1, Dp), lambda i: (0, 0)),
            pl.BlockSpec((1, Dp), lambda i: (0, 0)),
            pl.BlockSpec((1, Dp), lambda i: (0, 0)),
        ],
        out_specs=pl.BlockSpec((TM, D), lambda i: (i, 0)),
        compiler_params=pltpu.CompilerParams(dimension_semantics=("parallel",)),
        cost_estimate=cost,
    )(col, wmat, bias2d, gamma2d, beta2d)


# ----------------------------------------------------------------------------
# Kernel 2: fused Positional (depthwise 3x3 conv -> sigmoid gate) + LayerNorm
# ----------------------------------------------------------------------------
def _shift_w(x, direction):
    """Shift x (R, Wo, Dp) by one pixel along Wo, zero-filling the edge (bf16-safe).

    direction=+1 -> result[:, c] = x[:, c-1]  (left neighbour, col 0 zeroed)
    direction=-1 -> result[:, c] = x[:, c+1]  (right neighbour, col Wo-1 zeroed)
    Pure data movement (ld/st slots) — no full-tile VPU selects, since kernel 2
    is VALU-bound.
    """
    R, Wo, Dp = x.shape
    zero = jnp.zeros((R, 1, Dp), x.dtype)
    if direction == 1:
        return jnp.concatenate([zero, x[:, : Wo - 1, :]], axis=1)
    return jnp.concatenate([x[:, 1:, :], zero], axis=1)


def _pos_ln_kernel(center_ref, top_ref, bot_ref, dww_ref, dwb_ref, g_ref, bt_ref,
                   o_ref, *, D, eps):
    # center_ref: (1, TH, Wo, Dp) bf16 -- current row-tile of the feature map
    # top_ref/bot_ref: (1, 1, Wo, Dp) bf16 -- halo rows above/below
    # dww_ref: (9, Dp) bf16   dwb/g/bt: (1, Dp) f32
    # o_ref  : (1, TH, Wo, D) f32  (unpadded embedding dim, written directly)
    xc = center_ref[0]                                     # (TH, Wo, Dp) bf16
    TH = xc.shape[0]

    t = pl.program_id(1)
    last = pl.num_programs(1) - 1
    # Halo rows: index_map clamps to a valid row; zero them at the image border
    # so the depthwise conv sees zero padding (matches Conv2d padding=1).
    top = jnp.where(t == 0, 0.0, top_ref[0])               # (1, Wo, Dp) bf16
    bot = jnp.where(t == last, 0.0, bot_ref[0])            # (1, Wo, Dp) bf16
    xext = jnp.concatenate([top, xc, bot], axis=0)          # (TH+2, Wo, Dp) bf16

    xl = _shift_w(xext, +1)   # left neighbour  (bf16)
    xr = _shift_w(xext, -1)   # right neighbour (bf16)

    # 9 depthwise MACs on bf16 operands (packed VALU on v6e/v7x), f32 accumulation.
    w = dww_ref[...]                                         # (9, Dp) bf16
    acc = None
    for di in range(3):
        rows = slice(di, di + TH)
        part = (w[3 * di + 0] * xl[rows]
                + w[3 * di + 1] * xext[rows]
                + w[3 * di + 2] * xr[rows]).astype(jnp.float32)
        acc = part if acc is None else acc + part
    conv = acc + dwb_ref[0]                                  # f32, bias added once
    gated = xc.astype(jnp.float32) * jax.nn.sigmoid(conv)    # Positional: x * sigmoid(dwconv(x))

    # LayerNorm over the REAL embedding dim D.  Padded lanes of `gated` are exact 0,
    # so sums over Dp equal sums over D; use E[x^2] - mean^2 (no lane masking).
    inv_d = 1.0 / D
    s1 = jnp.sum(gated, axis=-1, keepdims=True)
    s2 = jnp.sum(gated * gated, axis=-1, keepdims=True)
    mean = s1 * inv_d
    var = s2 * inv_d - mean * mean
    normed = (gated - mean) * jax.lax.rsqrt(var + eps)
    out = normed * g_ref[0] + bt_ref[0]
    if out.shape[-1] != D:
        out = out[..., :D]
    o_ref[0] = out.astype(o_ref.dtype)


def _pick_row_tiles(Ho, Wo, Dp, D, budget=12 << 20):
    """Choose #row-tiles: >=2 when possible (v7x megacore) with per-step VMEM <= budget."""
    def vmem_est(TH):
        halo_bf16 = 3 * (TH + 2) * Wo * Dp * 2                 # xext, xl, xr
        f32_tmps = 4 * TH * Wo * Dp * 4                        # conv acc, gate, gated, normed
        io = 2 * (TH * Wo * Dp * 2 + 2 * Wo * Dp * 2 + TH * Wo * D * 4)  # dbl-buffered blocks
        return halo_bf16 + f32_tmps + io

    divisors = [n for n in range(1, Ho + 1) if Ho % n == 0]
    for nT in divisors:                       # ascending => biggest tile that fits
        if nT >= 2 and vmem_est(Ho // nT) <= budget:
            return nT
    if Ho == 1:
        return 1
    return Ho                                 # TH = 1 fallback


def pos_layernorm(feat, dw_w, dw_b, gamma, beta, *, D, eps=1e-5):
    """feat: (B, Ho, Wo, Dp) bf16; params zero-padded to Dp lanes. Returns (B,Ho,Wo,D) f32."""
    B, Ho, Wo, Dp = feat.shape
    nT = _pick_row_tiles(Ho, Wo, Dp, D)
    TH = Ho // nT

    kernel = functools.partial(_pos_ln_kernel, D=D, eps=eps)

    def center_map(b, t):
        return (b, t, 0, 0)

    def halo_top_map(b, t):
        return (b, jnp.maximum(t * TH - 1, 0), 0, 0)

    def halo_bot_map(b, t):
        return (b, jnp.minimum(t * TH + TH, Ho - 1), 0, 0)

    return pl.pallas_call(
        kernel,
        out_shape=jax.ShapeDtypeStruct((B, Ho, Wo, D), jnp.float32),
        grid=(B, nT),
        in_specs=[
            pl.BlockSpec((1, TH, Wo, Dp), center_map),
            pl.BlockSpec((1, 1, Wo, Dp), halo_top_map),
            pl.BlockSpec((1, 1, Wo, Dp), halo_bot_map),
            pl.BlockSpec((9, Dp), lambda b, t: (0, 0)),
            pl.BlockSpec((1, Dp), lambda b, t: (0, 0)),
            pl.BlockSpec((1, Dp), lambda b, t: (0, 0)),
            pl.BlockSpec((1, Dp), lambda b, t: (0, 0)),
        ],
        out_specs=pl.BlockSpec((1, TH, Wo, D), center_map),
        compiler_params=pltpu.CompilerParams(
            dimension_semantics=("parallel", "parallel"),
            vmem_limit_bytes=32 * 1024 * 1024),
    )(feat, feat, feat, dw_w, dw_b, gamma, beta)


# ----------------------------------------------------------------------------
# PatchEmbed forward
# ----------------------------------------------------------------------------
def _im2col_nhwc(x_nchw, k, stride, pad, Ho, Wo):
    """(B, C, H, W) -> (B*Ho*Wo, k*k*C); column order (ki, kj, c), no post-transpose."""
    B, C, H, W = x_nchw.shape
    x = jnp.transpose(x_nchw, (0, 2, 3, 1))                                # NHWC
    xp = jnp.pad(x, ((0, 0), (pad, pad), (pad, pad), (0, 0)))
    pieces = []
    for ki in range(k):
        for kj in range(k):
            pieces.append(
                xp[:, ki:ki + stride * Ho:stride, kj:kj + stride * Wo:stride, :])
    col = jnp.concatenate(pieces, axis=-1)                                 # (B,Ho,Wo,k*k*C)
    return col.reshape(B * Ho * Wo, k * k * C)


@functools.partial(jax.jit, static_argnames=("patch_size", "stride", "with_pos", "eps"))
def _patch_embed_impl(x, params, patch_size, stride, with_pos, eps):
    B, C, H, W = x.shape
    k = patch_size
    pad = k // 2
    Ho = (H + 2 * pad - k) // stride + 1
    Wo = (W + 2 * pad - k) // stride + 1
    D = params["proj_w"].shape[0]
    K = C * k * k
    Dp = _round_up(D, 128)          # lane-align only the embedding dim

    # ---- im2col (XLA glue) on a bf16 input; K left unpadded (full-extent block).
    col = _im2col_nhwc(x.astype(jnp.bfloat16), k, stride, pad, Ho, Wo)     # (M, K) bf16

    # proj conv == matmul with reshaped weight (D,C,k,k) -> (k*k*C, D), D zero-padded.
    wmat = jnp.transpose(params["proj_w"], (2, 3, 1, 0)).reshape(K, D)
    wmat = jnp.pad(wmat, ((0, 0), (0, Dp - D))).astype(jnp.bfloat16)
    bias = jnp.pad(params["proj_b"], (0, Dp - D)).reshape(1, Dp).astype(jnp.float32)
    ln_g = jnp.pad(params["ln_g"], (0, Dp - D)).reshape(1, Dp).astype(jnp.float32)
    ln_b = jnp.pad(params["ln_b"], (0, Dp - D)).reshape(1, Dp).astype(jnp.float32)

    if not with_pos:
        # LayerNorm fused into the matmul epilogue; no feature-map HBM round trip.
        out = proj_matmul_ln(col, wmat, bias, ln_g, ln_b, D=D, eps=eps)    # (M, D) f32
        return out.reshape(B, Ho * Wo, D)

    feat = proj_matmul(col, wmat, bias)                     # (B*Ho*Wo, Dp) bf16
    feat = feat.reshape(B, Ho, Wo, Dp)

    dw_w = jnp.pad(params["dw_w"], ((0, 0), (0, Dp - D))).astype(jnp.bfloat16)
    dw_b = jnp.pad(params["dw_b"], (0, Dp - D)).reshape(1, Dp).astype(jnp.float32)

    out = pos_layernorm(feat, dw_w, dw_b, ln_g, ln_b, D=D, eps=eps)        # (B,Ho,Wo,D) f32
    return out.reshape(B, Ho * Wo, D)


def patch_embed_forward(x, params, *, patch_size=7, stride=4, with_pos=True, eps=1e-5):
    """x: (B, C_in, H, W) float32 (NCHW, like PyTorch). Returns ((B, Ho*Wo, D), Ho, Wo)."""
    _, _, H, W = x.shape
    k = patch_size
    pad = k // 2
    Ho = (H + 2 * pad - k) // stride + 1
    Wo = (W + 2 * pad - k) // stride + 1
    out = _patch_embed_impl(x, params, patch_size, stride, with_pos, eps)
    return out, Ho, Wo


# ----------------------------------------------------------------------------
# Deterministic parameter init (synthetic; shapes follow the PyTorch __init__)
# ----------------------------------------------------------------------------
def init_params(key, in_chans, embed_dim, patch_size):
    k = patch_size
    keys = jax.random.split(key, 6)
    fan_in = in_chans * k * k
    params = {
        "proj_w": jax.random.normal(keys[0], (embed_dim, in_chans, k, k), jnp.float32)
        / math.sqrt(fan_in),
        "proj_b": 0.01 * jax.random.normal(keys[1], (embed_dim,), jnp.float32),
        # depthwise 3x3 (groups=embed_dim): PyTorch (D,1,3,3) must be imported as
        # permute(2,3,0,1).reshape(9, D) so that row index == ki*3 + kj.
        "dw_w": jax.random.normal(keys[2], (9, embed_dim), jnp.float32) / 3.0,
        "dw_b": 0.01 * jax.random.normal(keys[3], (embed_dim,), jnp.float32),
        "ln_g": 1.0 + 0.1 * jax.random.normal(keys[4], (embed_dim,), jnp.float32),
        "ln_b": 0.1 * jax.random.normal(keys[5], (embed_dim,), jnp.float32),
    }
    return params


if __name__ == "__main__":
    B, C_in, H, W = 2, 4, 16, 16
    embed_dim, patch_size, stride = 32, 7, 4

    key = jax.random.PRNGKey(0)
    kx, kp = jax.random.split(key)
    x = jax.random.normal(kx, (B, C_in, H, W), jnp.float32)
    params = init_params(kp, C_in, embed_dim, patch_size)

    out, Ho, Wo = patch_embed_forward(
        x, params, patch_size=patch_size, stride=stride, with_pos=True
    )
    out = jax.block_until_ready(out)
    assert out.shape == (B, Ho * Wo, embed_dim), out.shape
    assert bool(jnp.all(jnp.isfinite(out)))

    # Also exercise the with_pos=False path (LayerNorm fused into the matmul kernel).
    out2, _, _ = patch_embed_forward(
        x, params, patch_size=patch_size, stride=stride, with_pos=False
    )
    out2 = jax.block_until_ready(out2)
    assert out2.shape == (B, Ho * Wo, embed_dim), out2.shape
    assert bool(jnp.all(jnp.isfinite(out2)))

    print("KERNEL_OK")
</pallas_src>

<mosaic_0001>
module attributes {stable_mosaic.version = 11 : i64} {
  func.func @_proj_matmul_kernel(%arg0: i32, %arg1: memref<16x196xbf16, #tpu.memory_space<vmem>>, %arg2: memref<196x128xbf16, #tpu.memory_space<vmem>>, %arg3: memref<1x128xf32, #tpu.memory_space<vmem>>, %arg4: memref<16x128xbf16, #tpu.memory_space<vmem>>) attributes {dimension_semantics = [#tpu.dimension_semantics<parallel>], iteration_bounds = array<i64: 2>, scalar_prefetch = 0 : i64, scratch_operands = 0 : i64, tpu.core_type = #tpu.core_type<tc>, window_params = [{transform_indices = @transform_0, window_bounds = array<i64: 16, 196>}, {pipeline_mode = #tpu.pipeline_mode<synchronous>, transform_indices = @transform_1, window_bounds = array<i64: 196, 128>}, {pipeline_mode = #tpu.pipeline_mode<synchronous>, transform_indices = @transform_2, window_bounds = array<i64: 1, 128>}, {transform_indices = @transform_3, window_bounds = array<i64: 16, 128>}]} {
    %c0 = arith.constant 0 : index
    %c0_0 = arith.constant 0 : index
    %0 = vector.load %arg1[%c0, %c0_0] : memref<16x196xbf16, #tpu.memory_space<vmem>>, vector<16x196xbf16>
    %c0_1 = arith.constant 0 : index
    %c0_2 = arith.constant 0 : index
    %1 = vector.load %arg2[%c0_1, %c0_2] : memref<196x128xbf16, #tpu.memory_space<vmem>>, vector<196x128xbf16>
    %cst = arith.constant dense<0.000000e+00> : vector<16x128xf32>
    %2 = tpu.matmul %0, %1, %cst {dimension_numbers = #tpu.dot_dimension_numbers<[1], [0], [0], [1], [0, 0, 1, 1], [], []>} : vector<16x196xbf16>, vector<196x128xbf16>, vector<16x128xf32> -> vector<16x128xf32>
    %c0_3 = arith.constant 0 : index
    %c0_4 = arith.constant 0 : index
    %3 = vector.load %arg3[%c0_3, %c0_4] : memref<1x128xf32, #tpu.memory_space<vmem>>, vector<1x128xf32>
    %4 = vector.broadcast %3 : vector<1x128xf32> to vector<16x128xf32>
    %5 = arith.addf %2, %4 : vector<16x128xf32>
    %6 = arith.truncf %5 : vector<16x128xf32> to vector<16x128xbf16>
    %c0_5 = arith.constant 0 : index
    %c0_6 = arith.constant 0 : index
    %7 = vector.load %arg4[%c0_5, %c0_6] : memref<16x128xbf16, #tpu.memory_space<vmem>>, vector<16x128xbf16>
    tpu.vector_store %arg4[%c0_5, %c0_6], %6 {strides = array<i32>} : memref<16x128xbf16, #tpu.memory_space<vmem>>, vector<16x128xbf16>,
    return
  }
  func.func @transform_0(%arg0: i32) -> (i32, i32) {
    %c0_i32 = arith.constant 0 : i32
    %c0_i32_0 = arith.constant 0 : i32
    return %arg0, %c0_i32 : i32, i32
  }
  func.func @transform_1(%arg0: i32) -> (i32, i32) {
    %c0_i32 = arith.constant 0 : i32
    %c0_i32_0 = arith.constant 0 : i32
    %c0_i32_1 = arith.constant 0 : i32
    return %c0_i32, %c0_i32_0 : i32, i32
  }
  func.func @transform_2(%arg0: i32) -> (i32, i32) {
    %c0_i32 = arith.constant 0 : i32
    %c0_i32_0 = arith.constant 0 : i32
    %c0_i32_1 = arith.constant 0 : i32
    return %c0_i32, %c0_i32_0 : i32, i32
  }
  func.func @transform_3(%arg0: i32) -> (i32, i32) {
    %c0_i32 = arith.constant 0 : i32
    %c0_i32_0 = arith.constant 0 : i32
    return %arg0, %c0_i32 : i32, i32
  }
}

module attributes {stable_mosaic.version = 11 : i64} {
  func.func @_pos_ln_kernel(%arg0: i32, %arg1: i32, %arg2: memref<1x2x4x128xbf16, #tpu.memory_space<vmem>>, %arg3: memref<1x1x4x128xbf16, #tpu.memory_space<vmem>>, %arg4: memref<1x1x4x128xbf16, #tpu.memory_space<vmem>>, %arg5: memref<9x128xbf16, #tpu.memory_space<vmem>>, %arg6: memref<1x128xf32, #tpu.memory_space<vmem>>, %arg7: memref<1x128xf32, #tpu.memory_space<vmem>>, %arg8: memref<1x128xf32, #tpu.memory_space<vmem>>, %arg9: memref<1x2x4x32xf32, #tpu.memory_space<vmem>>) attributes {dimension_semantics = [#tpu.dimension_semantics<parallel>, #tpu.dimension_semantics<parallel>], iteration_bounds = array<i64: 2, 2>, scalar_prefetch = 0 : i64, scratch_operands = 0 : i64, tpu.core_type = #tpu.core_type<tc>, window_params = [{transform_indices = @transform_0, window_bounds = array<i64: 1, 2, 4, 128>}, {transform_indices = @transform_1, window_bounds = array<i64: 1, 1, 4, 128>}, {transform_indices = @transform_2, window_bounds = array<i64: 1, 1, 4, 128>}, {pipeline_mode = #tpu.pipeline_mode<synchronous>, transform_indices = @transform_3, window_bounds = array<i64: 9, 128>}, {pipeline_mode = #tpu.pipeline_mode<synchronous>, transform_indices = @transform_4, window_bounds = array<i64: 1, 128>}, {pipeline_mode = #tpu.pipeline_mode<synchronous>, transform_indices = @transform_5, window_bounds = array<i64: 1, 128>}, {pipeline_mode = #tpu.pipeline_mode<synchronous>, transform_indices = @transform_6, window_bounds = array<i64: 1, 128>}, {transform_indices = @transform_7, window_bounds = array<i64: 1, 2, 4, 32>}]} {
    %c0 = arith.constant 0 : index
    %c0_0 = arith.constant 0 : index
    %c0_1 = arith.constant 0 : index
    %c0_2 = arith.constant 0 : index
    %0 = vector.load %arg2[%c0, %c0_0, %c0_1, %c0_2] : memref<1x2x4x128xbf16, #tpu.memory_space<vmem>>, vector<1x2x4x128xbf16>
    %1 = vector.shape_cast %0 : vector<1x2x4x128xbf16> to vector<2x4x128xbf16>
    %c0_i32 = arith.constant 0 : i32
    %2 = arith.cmpi eq, %arg1, %c0_i32 : i32
    %c0_3 = arith.constant 0 : index
    %c0_4 = arith.constant 0 : index
    %c0_5 = arith.constant 0 : index
    %c0_6 = arith.constant 0 : index
    %3 = vector.load %arg3[%c0_3, %c0_4, %c0_5, %c0_6] : memref<1x1x4x128xbf16, #tpu.memory_space<vmem>>, vector<1x1x4x128xbf16>
    %4 = vector.shape_cast %3 : vector<1x1x4x128xbf16> to vector<1x4x128xbf16>
    %cst = arith.constant 0.000000e+00 : f32
    %5 = arith.truncf %cst : f32 to bf16
    %6 = vector.broadcast %5 : bf16 to vector<1x4x128xbf16>
    %7 = arith.select %2, %6, %4 : vector<1x4x128xbf16>
    %c1_i32 = arith.constant 1 : i32
    %8 = arith.cmpi eq, %arg1, %c1_i32 : i32
    %c0_7 = arith.constant 0 : index
    %c0_8 = arith.constant 0 : index
    %c0_9 = arith.constant 0 : index
    %c0_10 = arith.constant 0 : index
    %9 = vector.load %arg4[%c0_7, %c0_8, %c0_9, %c0_10] : memref<1x1x4x128xbf16, #tpu.memory_space<vmem>>, vector<1x1x4x128xbf16>
    %10 = vector.shape_cast %9 : vector<1x1x4x128xbf16> to vector<1x4x128xbf16>
    %cst_11 = arith.constant 0.000000e+00 : f32
    %11 = arith.truncf %cst_11 : f32 to bf16
    %12 = vector.broadcast %11 : bf16 to vector<1x4x128xbf16>
    %13 = arith.select %8, %12, %10 : vector<1x4x128xbf16>
    %14 = tpu.concatenate %7, %1, %13 in 0 : vector<1x4x128xbf16>, vector<2x4x128xbf16>, vector<1x4x128xbf16> -> vector<4x4x128xbf16>
    %cst_12 = arith.constant 0.000000e+00 : bf16
    %15 = vector.broadcast %cst_12 : bf16 to vector<4x1x128xbf16>
    %16 = vector.extract_strided_slice %14 {offsets = [0, 0, 0], sizes = [4, 3, 128], strides = [1, 1, 1]} : vector<4x4x128xbf16> to vector<4x3x128xbf16>
    %17 = tpu.concatenate %15, %16 in 1 : vector<4x1x128xbf16>, vector<4x3x128xbf16> -> vector<4x4x128xbf16>
    %cst_13 = arith.constant 0.000000e+00 : bf16
    %18 = vector.broadcast %cst_13 : bf16 to vector<4x1x128xbf16>
    %19 = vector.extract_strided_slice %14 {offsets = [0, 1, 0], sizes = [4, 3, 128], strides = [1, 1, 1]} : vector<4x4x128xbf16> to vector<4x3x128xbf16>
    %20 = tpu.concatenate %19, %18 in 1 : vector<4x3x128xbf16>, vector<4x1x128xbf16> -> vector<4x4x128xbf16>
    %c0_14 = arith.constant 0 : index
    %c0_15 = arith.constant 0 : index
    %21 = vector.load %arg5[%c0_14, %c0_15] : memref<9x128xbf16, #tpu.memory_space<vmem>>, vector<9x128xbf16>
    %22 = vector.extract_strided_slice %21 {offsets = [0, 0], sizes = [1, 128], strides = [1, 1]} : vector<9x128xbf16> to vector<1x128xbf16>
    %23 = vector.shape_cast %22 : vector<1x128xbf16> to vector<128xbf16>
    %24 = vector.extract_strided_slice %17 {offsets = [0, 0, 0], sizes = [2, 4, 128], strides = [1, 1, 1]} : vector<4x4x128xbf16> to vector<2x4x128xbf16>
    %25 = vector.shape_cast %23 : vector<128xbf16> to vector<1x1x128xbf16>
    %26 = vector.broadcast %25 : vector<1x1x128xbf16> to vector<2x4x128xbf16>
    %27 = arith.mulf %26, %24 : vector<2x4x128xbf16>
    %28 = vector.extract_strided_slice %21 {offsets = [1, 0], sizes = [1, 128], strides = [1, 1]} : vector<9x128xbf16> to vector<1x128xbf16>
    %29 = vector.shape_cast %28 : vector<1x128xbf16> to vector<128xbf16>
    %30 = vector.extract_strided_slice %14 {offsets = [0, 0, 0], sizes = [2, 4, 128], strides = [1, 1, 1]} : vector<4x4x128xbf16> to vector<2x4x128xbf16>
    %31 = vector.shape_cast %29 : vector<128xbf16> to vector<1x1x128xbf16>
    %32 = vector.broadcast %31 : vector<1x1x128xbf16> to vector<2x4x128xbf16>
    %33 = arith.mulf %32, %30 : vector<2x4x128xbf16>
    %34 = arith.addf %27, %33 : vector<2x4x128xbf16>
    %35 = vector.extract_strided_slice %21 {offsets = [2, 0], sizes = [1, 128], strides = [1, 1]} : vector<9x128xbf16> to vector<1x128xbf16>
    %36 = vector.shape_cast %35 : vector<1x128xbf16> to vector<128xbf16>
    %37 = vector.extract_strided_slice %20 {offsets = [0, 0, 0], sizes = [2, 4, 128], strides = [1, 1, 1]} : vector<4x4x128xbf16> to vector<2x4x128xbf16>
    %38 = vector.shape_cast %36 : vector<128xbf16> to vector<1x1x128xbf16>
    %39 = vector.broadcast %38 : vector<1x1x128xbf16> to vector<2x4x128xbf16>
    %40 = arith.mulf %39, %37 : vector<2x4x128xbf16>
    %41 = arith.addf %34, %40 : vector<2x4x128xbf16>
    %42 = arith.extf %41 : vector<2x4x128xbf16> to vector<2x4x128xf32>
    %43 = vector.extract_strided_slice %21 {offsets = [3, 0], sizes = [1, 128], strides = [1, 1]} : vector<9x128xbf16> to vector<1x128xbf16>
    %44 = vector.shape_cast %43 : vector<1x128xbf16> to vector<128xbf16>
    %45 = vector.extract_strided_slice %17 {offsets = [1, 0, 0], sizes = [2, 4, 128], strides = [1, 1, 1]} : vector<4x4x128xbf16> to vector<2x4x128xbf16>
    %46 = vector.shape_cast %44 : vector<128xbf16> to vector<1x1x128xbf16>
    %47 = vector.broadcast %46 : vector<1x1x128xbf16> to vector<2x4x128xbf16>
    %48 = arith.mulf %47, %45 : vector<2x4x128xbf16>
    %49 = vector.extract_strided_slice %21 {offsets = [4, 0], sizes = [1, 128], strides = [1, 1]} : vector<9x128xbf16> to vector<1x128xbf16>
    %50 = vector.shape_cast %49 : vector<1x128xbf16> to vector<128xbf16>
    %51 = vector.extract_strided_slice %14 {offsets = [1, 0, 0], sizes = [2, 4, 128], strides = [1, 1, 1]} : vector<4x4x128xbf16> to vector<2x4x128xbf16>
    %52 = vector.shape_cast %50 : vector<128xbf16> to vector<1x1x128xbf16>
    %53 = vector.broadcast %52 : vector<1x1x128xbf16> to vector<2x4x128xbf16>
    %54 = arith.mulf %53, %51 : vector<2x4x128xbf16>
    %55 = arith.addf %48, %54 : vector<2x4x128xbf16>
    %56 = vector.extract_strided_slice %21 {offsets = [5, 0], sizes = [1, 128], strides = [1, 1]} : vector<9x128xbf16> to vector<1x128xbf16>
    %57 = vector.shape_cast %56 : vector<1x128xbf16> to vector<128xbf16>
    %58 = vector.extract_strided_slice %20 {offsets = [1, 0, 0], sizes = [2, 4, 128], strides = [1, 1, 1]} : vector<4x4x128xbf16> to vector<2x4x128xbf16>
    %59 = vector.shape_cast %57 : vector<128xbf16> to vector<1x1x128xbf16>
    %60 = vector.broadcast %59 : vector<1x1x128xbf16> to vector<2x4x128xbf16>
    %61 = arith.mulf %60, %58 : vector<2x4x128xbf16>
    %62 = arith.addf %55, %61 : vector<2x4x128xbf16>
    %63 = arith.extf %62 : vector<2x4x128xbf16> to vector<2x4x128xf32>
    %64 = arith.addf %42, %63 : vector<2x4x128xf32>
    %65 = vector.extract_strided_slice %21 {offsets = [6, 0], sizes = [1, 128], strides = [1, 1]} : vector<9x128xbf16> to vector<1x128xbf16>
    %66 = vector.shape_cast %65 : vector<1x128xbf16> to vector<128xbf16>
    %67 = vector.extract_strided_slice %17 {offsets = [2, 0, 0], sizes = [2, 4, 128], strides = [1, 1, 1]} : vector<4x4x128xbf16> to vector<2x4x128xbf16>
    %68 = vector.shape_cast %66 : vector<128xbf16> to vector<1x1x128xbf16>
    %69 = vector.broadcast %68 : vector<1x1x128xbf16> to vector<2x4x128xbf16>
    %70 = arith.mulf %69, %67 : vector<2x4x128xbf16>
    %71 = vector.extract_strided_slice %21 {offsets = [7, 0], sizes = [1, 128], strides = [1, 1]} : vector<9x128xbf16> to vector<1x128xbf16>
    %72 = vector.shape_cast %71 : vector<1x128xbf16> to vector<128xbf16>
    %73 = vector.extract_strided_slice %14 {offsets = [2, 0, 0], sizes = [2, 4, 128], strides = [1, 1, 1]} : vector<4x4x128xbf16> to vector<2x4x128xbf16>
    %74 = vector.shape_cast %72 : vector<128xbf16> to vector<1x1x128xbf16>
    %75 = vector.broadcast %74 : vector<1x1x128xbf16> to vector<2x4x128xbf16>
    %76 = arith.mulf %75, %73 : vector<2x4x128xbf16>
    %77 = arith.addf %70, %76 : vector<2x4x128xbf16>
    %78 = vector.extract_strided_slice %21 {offsets = [8, 0], sizes = [1, 128], strides = [1, 1]} : vector<9x128xbf16> to vector<1x128xbf16>
    %79 = vector.shape_cast %78 : vector<1x128xbf16> to vector<128xbf16>
    %80 = vector.extract_strided_slice %20 {offsets = [2, 0, 0], sizes = [2, 4, 128], strides = [1, 1, 1]} : vector<4x4x128xbf16> to vector<2x4x128xbf16>
    %81 = vector.shape_cast %79 : vector<128xbf16> to vector<1x1x128xbf16>
    %82 = vector.broadcast %81 : vector<1x1x128xbf16> to vector<2x4x128xbf16>
    %83 = arith.mulf %82, %80 : vector<2x4x128xbf16>
    %84 = arith.addf %77, %83 : vector<2x4x128xbf16>
    %85 = arith.extf %84 : vector<2x4x128xbf16> to vector<2x4x128xf32>
    %86 = arith.addf %64, %85 : vector<2x4x128xf32>
    %c0_16 = arith.constant 0 : index
    %c0_17 = arith.constant 0 : index
    %87 = vector.load %arg6[%c0_16, %c0_17] : memref<1x128xf32, #tpu.memory_space<vmem>>, vector<1x128xf32>
    %88 = vector.shape_cast %87 : vector<1x128xf32> to vector<128xf32>
    %89 = vector.shape_cast %88 : vector<128xf32> to vector<1x1x128xf32>
    %90 = vector.broadcast %89 : vector<1x1x128xf32> to vector<2x4x128xf32>
    %91 = arith.addf %86, %90 : vector<2x4x128xf32>
    %92 = arith.extf %1 : vector<2x4x128xbf16> to vector<2x4x128xf32>
    %93 = arith.negf %91 : vector<2x4x128xf32>
    %94 = math.exp %93 : vector<2x4x128xf32>
    %cst_18 = arith.constant 1.000000e+00 : f32
    %95 = vector.broadcast %cst_18 : f32 to vector<2x4x128xf32>
    %96 = arith.addf %95, %94 : vector<2x4x128xf32>
    %97 = arith.divf %95, %96 : vector<2x4x128xf32>
    %98 = arith.mulf %92, %97 : vector<2x4x128xf32>
    %cst_19 = arith.constant dense<0.000000e+00> : vector<2x4xf32>
    %99 = vector.multi_reduction <add>, %98, %cst_19 [2] : vector<2x4x128xf32> to vector<2x4xf32>
    %100 = vector.shape_cast %99 : vector<2x4xf32> to vector<2x4x1xf32>
    %101 = arith.mulf %98, %98 : vector<2x4x128xf32>
    %cst_20 = arith.constant dense<0.000000e+00> : vector<2x4xf32>
    %102 = vector.multi_reduction <add>, %101, %cst_20 [2] : vector<2x4x128xf32> to vector<2x4xf32>
    %103 = vector.shape_cast %102 : vector<2x4xf32> to vector<2x4x1xf32>
    %cst_21 = arith.constant 3.125000e-02 : f32
    %104 = vector.broadcast %cst_21 : f32 to vector<2x4x1xf32>
    %105 = arith.mulf %100, %104 : vector<2x4x1xf32>
    %cst_22 = arith.constant 3.125000e-02 : f32
    %106 = vector.broadcast %cst_22 : f32 to vector<2x4x1xf32>
    %107 = arith.mulf %103, %106 : vector<2x4x1xf32>
    %108 = arith.mulf %105, %105 : vector<2x4x1xf32>
    %109 = arith.subf %107, %108 : vector<2x4x1xf32>
    %110 = vector.broadcast %105 : vector<2x4x1xf32> to vector<2x4x128xf32>
    %111 = arith.subf %98, %110 : vector<2x4x128xf32>
    %cst_23 = arith.constant 9.99999974E-6 : f32
    %112 = vector.broadcast %cst_23 : f32 to vector<2x4x1xf32>
    %113 = arith.addf %109, %112 : vector<2x4x1xf32>
    %114 = math.rsqrt %113 : vector<2x4x1xf32>
    %115 = vector.broadcast %114 : vector<2x4x1xf32> to vector<2x4x128xf32>
    %116 = arith.mulf %111, %115 : vector<2x4x128xf32>
    %c0_24 = arith.constant 0 : index
    %c0_25 = arith.constant 0 : index
    %117 = vector.load %arg7[%c0_24, %c0_25] : memref<1x128xf32, #tpu.memory_space<vmem>>, vector<1x128xf32>
    %118 = vector.shape_cast %117 : vector<1x128xf32> to vector<128xf32>
    %119 = vector.shape_cast %118 : vector<128xf32> to vector<1x1x128xf32>
    %120 = vector.broadcast %119 : vector<1x1x128xf32> to vector<2x4x128xf32>
    %121 = arith.mulf %116, %120 : vector<2x4x128xf32>
    %c0_26 = arith.constant 0 : index
    %c0_27 = arith.constant 0 : index
    %122 = vector.load %arg8[%c0_26, %c0_27] : memref<1x128xf32, #tpu.memory_space<vmem>>, vector<1x128xf32>
    %123 = vector.shape_cast %122 : vector<1x128xf32> to vector<128xf32>
    %124 = vector.shape_cast %123 : vector<128xf32> to vector<1x1x128xf32>
    %125 = vector.broadcast %124 : vector<1x1x128xf32> to vector<2x4x128xf32>
    %126 = arith.addf %121, %125 : vector<2x4x128xf32>
    %127 = vector.extract_strided_slice %126 {offsets = [0, 0, 0], sizes = [2, 4, 32], strides = [1, 1, 1]} : vector<2x4x128xf32> to vector<2x4x32xf32>
    %c0_28 = arith.constant 0 : index
    %c0_29 = arith.constant 0 : index
    %c0_30 = arith.constant 0 : index
    %c0_31 = arith.constant 0 : index
    %128 = vector.load %arg9[%c0_28, %c0_29, %c0_30, %c0_31] : memref<1x2x4x32xf32, #tpu.memory_space<vmem>>, vector<1x2x4x32xf32>
    %129 = vector.shape_cast %128 : vector<1x2x4x32xf32> to vector<2x4x32xf32>
    %130 = vector.shape_cast %127 : vector<2x4x32xf32> to vector<1x2x4x32xf32>
    tpu.vector_store %arg9[%c0_28, %c0_29, %c0_30, %c0_31], %130 {strides = array<i32>} : memref<1x2x4x32xf32, #tpu.memory_space<vmem>>, vector<1x2x4x32xf32>,
    return
  }
  func.func @transform_0(%arg0: i32, %arg1: i32) -> (i32, i32, i32, i32) {
    %c0_i32 = arith.constant 0 : i32
    %c0_i32_0 = arith.constant 0 : i32
    %c0_i32_1 = arith.constant 0 : i32
    return %arg0, %arg1, %c0_i32, %c0_i32_0 : i32, i32, i32, i32
  }
  func.func @transform_1(%arg0: i32, %arg1: i32) -> (i32, i32, i32, i32) {
    %c2_i32 = arith.constant 2 : i32
    %0 = arith.muli %arg1, %c2_i32 : i32
    %c1_i32 = arith.constant 1 : i32
    %1 = arith.subi %0, %c1_i32 : i32
    %c0_i32 = arith.constant 0 : i32
    %2 = arith.maxsi %1, %c0_i32 : i32
    %c0_i32_0 = arith.constant 0 : i32
    %c0_i32_1 = arith.constant 0 : i32
    %c0_i32_2 = arith.constant 0 : i32
    return %arg0, %2, %c0_i32_0, %c0_i32_1 : i32, i32, i32, i32
  }
  func.func @transform_2(%arg0: i32, %arg1: i32) -> (i32, i32, i32, i32) {
    %c2_i32 = arith.constant 2 : i32
    %0 = arith.muli %arg1, %c2_i32 : i32
    %c2_i32_0 = arith.constant 2 : i32
    %1 = arith.addi %0, %c2_i32_0 : i32
    %c3_i32 = arith.constant 3 : i32
    %2 = arith.minsi %1, %c3_i32 : i32
    %c0_i32 = arith.constant 0 : i32
    %c0_i32_1 = arith.constant 0 : i32
    %c0_i32_2 = arith.constant 0 : i32
    return %arg0, %2, %c0_i32, %c0_i32_1 : i32, i32, i32, i32
  }
  func.func @transform_3(%arg0: i32, %arg1: i32) -> (i32, i32) {
    %c0_i32 = arith.constant 0 : i32
    %c0_i32_0 = arith.constant 0 : i32
    %c0_i32_1 = arith.constant 0 : i32
    return %c0_i32, %c0_i32_0 : i32, i32
  }
  func.func @transform_4(%arg0: i32, %arg1: i32) -> (i32, i32) {
    %c0_i32 = arith.constant 0 : i32
    %c0_i32_0 = arith.constant 0 : i32
    %c0_i32_1 = arith.constant 0 : i32
    return %c0_i32, %c0_i32_0 : i32, i32
  }
  func.func @transform_5(%arg0: i32, %arg1: i32) -> (i32, i32) {
    %c0_i32 = arith.constant 0 : i32
    %c0_i32_0 = arith.constant 0 : i32
    %c0_i32_1 = arith.constant 0 : i32
    return %c0_i32, %c0_i32_0 : i32, i32
  }
  func.func @transform_6(%arg0: i32, %arg1: i32) -> (i32, i32) {
    %c0_i32 = arith.constant 0 : i32
    %c0_i32_0 = arith.constant 0 : i32
    %c0_i32_1 = arith.constant 0 : i32
    return %c0_i32, %c0_i32_0 : i32, i32
  }
  func.func @transform_7(%arg0: i32, %arg1: i32) -> (i32, i32, i32, i32) {
    %c0_i32 = arith.constant 0 : i32
    %c0_i32_0 = arith.constant 0 : i32
    %c0_i32_1 = arith.constant 0 : i32
    return %arg0, %arg1, %c0_i32, %c0_i32_0 : i32, i32, i32, i32
  }
}

</mosaic_0001>

<llo_original>
// kernel: _patch_embed_impl.2
$region0: #{_patch_embed_impl.2}
  #allocation0 [shape = 'u32[]', space=smem, size = 0x4, offset = 0x4, fixed_abs, tag = 'smem constant byte address 0x4 - core index']
  #allocation1 [shape = 'u32[144,128]{1,0:T(1,128)}', space=vmem, size = 0x12000, scoped, tag = 'internal scratch']
  %s0 = inlined_call_operand.vmem [shape: bf16[32,196], index: 0, kind: input, shape index: {}]
  %s1 = inlined_call_operand.vmem [shape: bf16[196,128], index: 1, kind: input, shape index: {}]
  %s2 = inlined_call_operand.vmem [shape: f32[1,128], index: 2, kind: input, shape index: {}]
  %s3 = inlined_call_operand.vmem [shape: bf16[32,128], index: 3, kind: output, shape index: {}]
  %s4 = sld [smem:[#allocation0]]
  $region45: #{_patch_embed_impl.2} parent=0
    _
  %s6 = ssub.s32 1, %s4
  %s7 = scalar_select 0, %s6, %s4
  loop: start=0, step=1, limit=4
  $region2: #{_patch_embed_impl.2} parent=0 // loop_pre_header
    _
  $region3: #{_patch_embed_impl.2} parent=0 // loop_header
    %s9 = sphi 0, %s13
    %p10 = scmp.ge.s32.totalorder %s9, 4
    %s19 = sphi 0, %s21
    %s22 = sphi 0, %s19
    %s23 = sphi 0, %s22
    %s39 = sphi 0, %s23
    %s43 = sphi 0, %s43
    %s45 = sphi 0, %s43
    %s46 = sphi 0, %s45
    %s60 = sphi 0, %s46
    %s64 = sphi 0, %s64
    %s66 = sphi 0, %s64
    %s67 = sphi 0, %s66
    %s81 = sphi 0, %s67
    %s87 = sphi 0, %s89
    %s90 = sphi 0, %s87
    %s91 = sphi 0, %s90
    %s107 = sphi 0, %s91
  $region4: #{_patch_embed_impl.2} parent=0 // loop_header_branch
    %12 = sbr.rel (%p10) target = $region8
  $region5: #{_patch_embed_impl.2} parent=0 // loop_body
    %s14 = ssub.s32 %s9, 1
    %s15 = ssub.s32 %s9, 2
    %s16 = sadd.s32 %s9, 1
    %s17 = ssub.s32 %s9, %s16
    %p18 = scmp.eq.s32.totalorder %s17, 0
    %s20 = sadd.s32 %s19, 1
    %s21 = scalar_select %p18, %s19, %s20
    %p24 = pneg %p18
    %p25 = scmp.eq.s32.totalorder %s9, 1
    %p26 = por %p24, %p25
    %p27 = scmp.ne.s32.totalorder %s19, %s22
    %p28 = scmp.eq.s32.totalorder %s9, 0
    %p29 = por %p27, %p28
    %p30 = scmp.ne.s32.totalorder %s19, %s22
    %p31 = scmp.eq.s32.totalorder %s14, 1
    %p32 = por %p30, %p31
    %p33 = scmp.ne.s32.totalorder %s22, %s23
    %p34 = scmp.eq.s32.totalorder %s14, 0
    %p35 = por %p33, %p34
    %p36 = scmp.ne.s32.totalorder %s22, %s23
    %p37 = scmp.eq.s32.totalorder %s15, 1
    %p38 = por %p36, %p37
    %p40 = scmp.ne.s32.totalorder %s23, %s39
    %p41 = scmp.eq.s32.totalorder %s15, 0
    %p42 = por %p40, %p41
    %s44 = sadd.s32 %s43, 1
    %p47 = scmp.eq.s32.totalorder %s9, 1
    %p48 = scmp.ne.s32.totalorder %s43, %s45
    %p49 = scmp.eq.s32.totalorder %s9, 0
    %p50 = por %p48, %p49
    %p51 = scmp.ne.s32.totalorder %s43, %s45
    %p52 = scmp.eq.s32.totalorder %s14, 1
    %p53 = por %p51, %p52
    %p54 = scmp.ne.s32.totalorder %s45, %s46
    %p55 = scmp.eq.s32.totalorder %s14, 0
    %p56 = por %p54, %p55
    %p57 = scmp.ne.s32.totalorder %s45, %s46
    %p58 = scmp.eq.s32.totalorder %s15, 1
    %p59 = por %p57, %p58
    %p61 = scmp.ne.s32.totalorder %s46, %s60
    %p62 = scmp.eq.s32.totalorder %s15, 0
    %p63 = por %p61, %p62
    %s65 = sadd.s32 %s64, 1
    %p68 = scmp.eq.s32.totalorder %s9, 1
    %p69 = scmp.ne.s32.totalorder %s64, %s66
    %p70 = scmp.eq.s32.totalorder %s9, 0
    %p71 = por %p69, %p70
    %p72 = scmp.ne.s32.totalorder %s64, %s66
    %p73 = scmp.eq.s32.totalorder %s14, 1
    %p74 = por %p72, %p73
    %p75 = scmp.ne.s32.totalorder %s66, %s67
    %p76 = scmp.eq.s32.totalorder %s14, 0
    %p77 = por %p75, %p76
    %p78 = scmp.ne.s32.totalorder %s66, %s67
    %p79 = scmp.eq.s32.totalorder %s15, 1
    %p80 = por %p78, %p79
    %p82 = scmp.ne.s32.totalorder %s67, %s81
    %p83 = scmp.eq.s32.totalorder %s15, 0
    %p84 = por %p82, %p83
    %s85 = ssub.s32 %s9, %s16
    %p86 = scmp.eq.s32.totalorder %s85, 0
    %s88 = sadd.s32 %s87, 1
    %s89 = scalar_select %p86, %s87, %s88
    %p92 = pneg %p86
    %p93 = scmp.eq.s32.totalorder %s9, 1
    %p94 = por %p92, %p93
    %p95 = scmp.ne.s32.totalorder %s87, %s90
    %p96 = scmp.eq.s32.totalorder %s9, 0
    %p97 = por %p95, %p96
    %p98 = scmp.ne.s32.totalorder %s87, %s90
    %p99 = scmp.eq.s32.totalorder %s14, 1
    %p100 = por %p98, %p99
    %p101 = scmp.ne.s32.totalorder %s90, %s91
    %p102 = scmp.eq.s32.totalorder %s14, 0
    %p103 = por %p101, %p102
    %p104 = scmp.ne.s32.totalorder %s90, %s91
    %p105 = scmp.eq.s32.totalorder %s15, 1
    %p106 = por %p104, %p105
    %p108 = scmp.ne.s32.totalorder %s91, %s107
    %p109 = scmp.eq.s32.totalorder %s15, 0
    %p110 = por %p108, %p109
    %p111 = scmp.le.s32.totalorder 1, %s9
    %p112 = scmp.lt.s32.totalorder %s9, 3
    %p113 = pnand %p111, %p112
    %p114 = pneg %p113
    // Predicated region
    $region9: #{_patch_embed_impl.2} parent=5 // pred_check
      _
    $region10: #{_patch_embed_impl.2} parent=5 // pred_check_branch
      %116 = sbr.rel (%p113) target = $region12
    $region11: #{_patch_embed_impl.2} parent=5 // pred_region
      %s117 = ssub.s32 %s9, 1
      // Predicated region
      $region13: #{_patch_embed_impl.2} parent=11 // pred_check
        %p118 = pneg %p56
      $region14: #{_patch_embed_impl.2} parent=11 // pred_check_branch
        %120 = sbr.rel (%p118) target = $region16
      $region15: #{_patch_embed_impl.2} parent=11 // pred_region
        _
      $region16: #{_patch_embed_impl.2} parent=11 // pred_fallthru
        _
      // Predicated region
      $region17: #{_patch_embed_impl.2} parent=11 // pred_check
        %p121 = pneg %p77
      $region18: #{_patch_embed_impl.2} parent=11 // pred_check_branch
        %123 = sbr.rel (%p121) target = $region20
      $region19: #{_patch_embed_impl.2} parent=11 // pred_region
        _
      $region20: #{_patch_embed_impl.2} parent=11 // pred_fallthru
        _
    $region12: #{_patch_embed_impl.2} parent=5 // pred_fallthru
      _
    %p124 = scmp.lt.s32.totalorder %s9, 2
    // Predicated region
    $region21: #{_patch_embed_impl.2} parent=5 // pred_check
      %p125 = pneg %p124
    $region22: #{_patch_embed_impl.2} parent=5 // pred_check_branch
      %127 = sbr.rel (%p125) target = $region24
    $region23: #{_patch_embed_impl.2} parent=5 // pred_region
      // Predicated region
      $region25: #{_patch_embed_impl.2} parent=23 // pred_check
        %p128 = pneg %p29
      $region26: #{_patch_embed_impl.2} parent=23 // pred_check_branch
        %130 = sbr.rel (%p128) target = $region28
      $region27: #{_patch_embed_impl.2} parent=23 // pred_region
        %s131 = smul.u32 2, %s9
        %p132 = scmp.lt.s32.totalorder %s131, 3
        %s133 = scalar_select %p132, %s131, 3
        %s134 = smul.addr %s133, 2
        %s135 = smul.addr %s134, 4
        %s136 = scalar_lea.vmem %s0, %s135
        %s137 = smul.u32 2, %s9
      $region28: #{_patch_embed_impl.2} parent=23 // pred_fallthru
        _
    $region24: #{_patch_embed_impl.2} parent=5 // pred_fallthru
      _
    %p138 = scmp.le.s32.totalorder 1, %s9
    %p139 = scmp.lt.s32.totalorder %s9, 3
    %p140 = pnand %p138, %p139
    %p141 = pneg %p140
    // Predicated region
    $region29: #{_patch_embed_impl.2} parent=5 // pred_check
      _
    $region30: #{_patch_embed_impl.2} parent=5 // pred_check_branch
      %143 = sbr.rel (%p140) target = $region32
    $region31: #{_patch_embed_impl.2} parent=5 // pred_region
      %s144 = ssub.s32 %s9, 1
      %s145 = smul.u32 2, %s14
      %p146 = scmp.lt.s32.totalorder %s145, 3
      %s147 = scalar_select %p146, %s145, 3
      %s148 = smul.addr %s147, 2
      %s149 = smul.addr %s148, 4
      %s150 = scalar_lea.vmem %s0, %s149
      %p151 = pneg %p35
      %p152 = pneg %p32
      %p153 = pneg %p56
      %p154 = pneg %p53
      %p155 = pneg %p77
      %p156 = pneg %p74
      %p157 = pneg %p103
      %p158 = pneg %p100
      %s159 = smul.u32 2, %s14
      %p160 = scmp.lt.s32.totalorder %s159, 3
      %s161 = scalar_select %p160, %s159, 3
      %s162 = smul.addr %s161, 4
      %s163 = scalar_lea.vmem %s3, %s162
      %s164 = smul.u32 2, %s14
      %p165 = scmp.lt.s32.totalorder %s164, 3
      %s166 = scalar_select %p165, %s164, 3
      %s167 = smul.addr %s166, 2
      %s168 = smul.addr %s167, 4
      %s169 = scalar_lea.vmem %s0, %s168
      %s170 = smul.u32 2, %s14
      %s171 = smul.u32 2, %s14
      %p172 = scmp.lt.s32.totalorder %s171, 3
      %s173 = scalar_select %p172, %s171, 3
      %s174 = smul.addr %s173, 4
      %s175 = scalar_lea.vmem %s3, %s174
      %s176 = smul.u32 2, %s14
      %v178 = vld [vmem:[%s169] sm:$0xff]
      %v179 = vld [vmem:[%s169 + $0x8] sm:$0xff]
      %v180 = vld [vmem:[%s1] sm:$0xf]
      %v181 = vld [vmem:[%s1 + $0x4] sm:$0xf]
      %v182 = vld [vmem:[%s1 + $0x8] sm:$0xf]
      %v183 = vld [vmem:[%s1 + $0xc] sm:$0xf]
      %v184 = vld [vmem:[%s1 + $0x10] sm:$0xf]
      %v185 = vld [vmem:[%s1 + $0x14] sm:$0xf]
      %v186 = vld [vmem:[%s1 + $0x18] sm:$0xf]
      %v187 = vld [vmem:[%s1 + $0x1c] sm:$0xf]
      %v188 = vld [vmem:[%s1 + $0x20] sm:$0xf]
      %v189 = vld [vmem:[%s1 + $0x24] sm:$0xf]
      %v190 = vld [vmem:[%s1 + $0x28] sm:$0xf]
      %v191 = vld [vmem:[%s1 + $0x2c] sm:$0xf]
      %v192 = vld [vmem:[%s1 + $0x30] sm:$0xf]
      %v193 = vld [vmem:[%s1 + $0x34] sm:$0xf]
      %v194 = vld [vmem:[%s1 + $0x38] sm:$0xf]
      %v195 = vld [vmem:[%s1 + $0x3c] sm:$0xf]
      %v196 = vld [vmem:[%s1 + $0x40] sm:$0xf]
      %v197 = vld [vmem:[%s1 + $0x44] sm:$0xf]
      %v198 = vld [vmem:[%s1 + $0x48] sm:$0xf]
      %v199 = vld [vmem:[%s1 + $0x4c] sm:$0xf]
      %v200 = vld [vmem:[%s1 + $0x50] sm:$0xf]
      %v201 = vld [vmem:[%s1 + $0x54] sm:$0xf]
      %v202 = vld [vmem:[%s1 + $0x58] sm:$0xf]
      %v203 = vld [vmem:[%s1 + $0x5c] sm:$0xf]
      %v204 = vld [vmem:[%s1 + $0x60] sm:$0x3]
      %v205 = vld [vmem:[%s2] sm:$0x1]
      %v207 = vlaneseq
      %v208 = vshrl.u32 %v207, 7
      %v209 = vsub.s32 0, %v208
      %v210 = vrot.slane %v205, %v209
      %v214 = vunpack.c.l.b16 %v178
      %v215 = vunpack.c.h.b16 %v178
      %v216 = vunpack.c.l.b16 %v179
      %v217 = vunpack.c.h.b16 %v179
      %v218 = vpack.c.b16 %v216, %v214
      %v219 = vpack.c.b16 %v217, %v215
      %v246 = vunpack.c.l.b16 %v180
      %v247 = vunpack.c.l.b16 %v181
      %v248 = vunpack.c.l.b16 %v182
      %v249 = vunpack.c.l.b16 %v183
      %v250 = vunpack.c.l.b16 %v184
      %v251 = vunpack.c.l.b16 %v185
      %v252 = vunpack.c.l.b16 %v186
      %v253 = vunpack.c.l.b16 %v187
      %v254 = vunpack.c.l.b16 %v188
      %v255 = vunpack.c.l.b16 %v189
      %v256 = vunpack.c.l.b16 %v190
      %v257 = vunpack.c.l.b16 %v191
      %v258 = vunpack.c.l.b16 %v192
      %v259 = vunpack.c.l.b16 %v193
      %v260 = vunpack.c.l.b16 %v194
      %v261 = vunpack.c.l.b16 %v195
      %v262 = vunpack.c.l.b16 %v196
      %v263 = vunpack.c.l.b16 %v197
      %v264 = vunpack.c.l.b16 %v198
      %v265 = vunpack.c.l.b16 %v199
      %v266 = vunpack.c.l.b16 %v200
      %v267 = vunpack.c.l.b16 %v201
      %v268 = vunpack.c.l.b16 %v202
      %v269 = vunpack.c.l.b16 %v203
      %v270 = vunpack.c.l.b16 %v204
      %v271 = vpack.c.b16 %v247, %v246
      %v272 = vpack.c.b16 %v249, %v248
      %v273 = vpack.c.b16 %v251, %v250
      %v274 = vpack.c.b16 %v253, %v252
      %v275 = vpack.c.b16 %v255, %v254
      %v276 = vpack.c.b16 %v257, %v256
      %v277 = vpack.c.b16 %v259, %v258
      %v278 = vpack.c.b16 %v261, %v260
      %v279 = vpack.c.b16 %v263, %v262
      %v280 = vpack.c.b16 %v265, %v264
      %v281 = vpack.c.b16 %v267, %v266
      %v282 = vpack.c.b16 %v269, %v268
      %v283 = vpack.c.b16 %v270, %v270
      %vm296 = vcmask 556032
      %v298 = vsel %vm296, %v219, 0
      %vm300 = vcmask 1041408
      %v302 = vsel %vm300, %v283, 0
      %304 = vmatprep.subr.bf16.mxu0 0
      %305 = vmatpush1.bf16.msra.mxu0 %v271
      %306 = vmatprep.subr.bf16.mxu0 0
      %307 = vmatpush1.bf16.msra.mxu0 %v272
      %308 = vmatprep.subr.bf16.mxu0 0
      %309 = vmatpush1.bf16.msra.mxu0 %v273
      %310 = vmatprep.subr.bf16.mxu0 0
      %311 = vmatpush1.bf16.msra.mxu0 %v274
      %312 = vmatprep.subr.bf16.mxu0 0
      %313 = vmatpush1.bf16.msra.mxu0 %v275
      %314 = vmatprep.subr.bf16.mxu0 0
      %315 = vmatpush1.bf16.msra.mxu0 %v276
      %316 = vmatprep.subr.bf16.mxu0 0
      %317 = vmatpush1.bf16.msra.mxu0 %v277
      %318 = vmatprep.subr.bf16.mxu0 0
      %319 = vmatpush1.bf16.msra.mxu0 %v278
      %320 = vmatprep.subr.bf16.mxu0 0
      %321 = vmatpush1.bf16.msra.mxu0 %v279
      %322 = vmatprep.subr.bf16.mxu0 0
      %323 = vmatpush1.bf16.msra.mxu0 %v280
      %324 = vmatprep.subr.bf16.mxu0 0
      %325 = vmatpush1.bf16.msra.mxu0 %v281
      %326 = vmatprep.subr.bf16.mxu0 0
      %327 = vmatpush1.bf16.msra.mxu0 %v282
      %328 = vmatprep.subr.bf16.mxu0 0
      %329 = vmatpush1.bf16.msra.mxu0 %v302
      %330 = vmatprep.subr.bf16.mxu0 0
      %331 = vmatpush1.bf16.msra.mxu0 0
      %332 = vmatprep.subr.bf16.mxu0 0
      %333 = vmatpush1.bf16.msra.mxu0 0
      %334 = vmatprep.subr.bf16.mxu0 0
      %335 = vmatpush1.bf16.msra.mxu0 0
      %336 = vmatprep.mubr.bf16.mxu0 %v298
      %337 = vmatmul.mubr.bf16.gmra.mrb[0].mxu0 %v218
      %v338 = vpop.f32.mrb[0].mxu0
      %v339 = vadd.f32 %v210, %v338
      %v340 = vpop.f32.mrb[0].mxu0
      %v341 = vpop.f32.mrb[0].mxu0
      %v342 = vadd.f32 %v210, %v341
      %v343 = vpop.f32.mrb[0].mxu0
      %344 = vdwg.mxu0
      %v345 = vpack.c.bf16 %v342, %v339
      %v347 = vunpack.c.l.b16 %v345
      %v348 = vunpack.c.h.b16 %v345
      %v349 = vpack.c.b16 %v347, %v347
      %v350 = vpack.c.b16 %v348, %v348
      %353 = vst [vmem:[%s175] sm:$0xf] %v349
      %354 = vst [vmem:[%s175 + $0x4] sm:$0xf] %v350
      %s355 = smul.u32 2, %s14
      %p356 = scmp.lt.s32.totalorder %s355, 3
      %s357 = scalar_select %p356, %s355, 3
      %s358 = smul.addr %s357, 4
      %s359 = scalar_lea.vmem %s3, %s358
      // Predicated region
      $region33: #{_patch_embed_impl.2} parent=31 // pred_check
        %p360 = pneg %p100
      $region34: #{_patch_embed_impl.2} parent=31 // pred_check_branch
        %362 = sbr.rel (%p360) target = $region36
      $region35: #{_patch_embed_impl.2} parent=31 // pred_region
        %s363 = smul.u32 2, %s14
      $region36: #{_patch_embed_impl.2} parent=31 // pred_fallthru
        _
    $region32: #{_patch_embed_impl.2} parent=5 // pred_fallthru
      _
    %p364 = scmp.le.s32.totalorder 2, %s9
    // Predicated region
    $region37: #{_patch_embed_impl.2} parent=5 // pred_check
      %p365 = pneg %p364
    $region38: #{_patch_embed_impl.2} parent=5 // pred_check_branch
      %367 = sbr.rel (%p365) target = $region40
    $region39: #{_patch_embed_impl.2} parent=5 // pred_region
      %s368 = ssub.s32 %s9, 2
      // Predicated region
      $region41: #{_patch_embed_impl.2} parent=39 // pred_check
        %p369 = pneg %p106
      $region42: #{_patch_embed_impl.2} parent=39 // pred_check_branch
        %371 = sbr.rel (%p369) target = $region44
      $region43: #{_patch_embed_impl.2} parent=39 // pred_region
        %s372 = smul.u32 2, %s15
        %p373 = scmp.lt.s32.totalorder %s372, 3
        %s374 = scalar_select %p373, %s372, 3
        %s375 = smul.addr %s374, 4
        %s376 = scalar_lea.vmem %s3, %s375
      $region44: #{_patch_embed_impl.2} parent=39 // pred_fallthru
        _
    $region40: #{_patch_embed_impl.2} parent=5 // pred_fallthru
      _
  $region6: #{_patch_embed_impl.2} parent=0 // loop_footer
    %s13 = sadd.s32 1, %s9
  $region7: #{_patch_embed_impl.2} parent=0 // loop_footer_branch
    %8 = sbr.rel target = $region3
  $region8: #{_patch_embed_impl.2} parent=0 // loop_exit
    _

// kernel: _patch_embed_impl.3
$region0: #{_patch_embed_impl.3}
  #allocation0 [shape = 'u32[]', space=smem, size = 0x4, offset = 0x4, fixed_abs, tag = 'smem constant byte address 0x4 - core index']
  #allocation1 [shape = 'u32[144,128]{1,0:T(1,128)}', space=vmem, size = 0x12000, scoped, tag = 'internal scratch']
  %s0 = inlined_call_operand.vmem [shape: bf16[2,4,4,128], index: 0, kind: input, shape index: {}, may-alias: {0,1,2}]
  %s1 = inlined_call_operand.vmem [shape: bf16[2,4,4,128], index: 1, kind: input, shape index: {}, may-alias: {0,1,2}]
  %s2 = inlined_call_operand.vmem [shape: bf16[2,4,4,128], index: 2, kind: input, shape index: {}, may-alias: {0,1,2}]
  %s3 = inlined_call_operand.vmem [shape: bf16[9,128], index: 3, kind: input, shape index: {}]
  %s4 = inlined_call_operand.vmem [shape: f32[1,128], index: 4, kind: input, shape index: {}]
  %s5 = inlined_call_operand.vmem [shape: f32[1,128], index: 5, kind: input, shape index: {}]
  %s6 = inlined_call_operand.vmem [shape: f32[1,128], index: 6, kind: input, shape index: {}]
  %s7 = inlined_call_operand.hbm [shape: f32[2,4,4,32], index: 7, kind: output, shape index: {}]
  %s8 = sld [smem:[#allocation0]]
  $region61: #{_patch_embed_impl.3} parent=0
    _
  %s10 = ssub.s32 1, %s8
  %s11 = scalar_select 0, %s10, %s8
  $region1: #{_patch_embed_impl.3} parent=0
    #allocation2 [shape = 'u8[8192]{0}', space=vmem, size = 0x2000, scoped, tag = 'output window, operand 0']
    #allocation3 [shape = 's32[2]{0}', space=sflag, size = 0x8, scoped, tag = 'scoped memory for _patch_embed_impl.3']
    %12 = vsyncpa [#allocation3], 0
    %s13 = scalar_lea.sflag [#allocation3], 1
    %14 = vsyncpa %s13, 0
    loop: start=0, step=1, limit=6
    $region2: #{_patch_embed_impl.3} parent=1 // loop_pre_header
      _
    $region3: #{_patch_embed_impl.3} parent=1 // loop_header
      %s16 = sphi 0, %s20
      %p17 = scmp.ge.s32.totalorder %s16, 6
      %s23 = sphi 0, %s35
      %s24 = sphi 0, %s31
      %s25 = sphi 0, %s23
      %s26 = sphi 0, %s24
      %s27 = sphi 0, %s25
      %s28 = sphi 0, %s26
      %s40 = sphi 0, %s42
      %s43 = sphi 0, %s40
      %s44 = sphi 0, %s43
      %s60 = sphi 0, %s44
      %s76 = sphi 0, %s78
      %s79 = sphi 0, %s76
      %s80 = sphi 0, %s79
      %s96 = sphi 0, %s80
      %s112 = sphi 0, %s114
      %s115 = sphi 0, %s112
      %s116 = sphi 0, %s115
      %s132 = sphi 0, %s116
      %s136 = sphi 0, %s136
      %s138 = sphi 0, %s136
      %s139 = sphi 0, %s138
      %s153 = sphi 0, %s139
      %s157 = sphi 0, %s157
      %s159 = sphi 0, %s157
      %s160 = sphi 0, %s159
      %s174 = sphi 0, %s160
      %s178 = sphi 0, %s178
      %s180 = sphi 0, %s178
      %s181 = sphi 0, %s180
      %s195 = sphi 0, %s181
      %s199 = sphi 0, %s199
      %s201 = sphi 0, %s199
      %s202 = sphi 0, %s201
      %s216 = sphi 0, %s202
      %s224 = sphi 0, %s226
      %s227 = sphi 0, %s224
      %s228 = sphi 0, %s227
      %s244 = sphi 0, %s228
    $region4: #{_patch_embed_impl.3} parent=1 // loop_header_branch
      %19 = sbr.rel (%p17) target = $region8
    $region5: #{_patch_embed_impl.3} parent=1 // loop_body
      %s21 = ssub.s32 %s16, 1
      %s22 = ssub.s32 %s16, 2
      %s29 = sadd.s32 1, %s24
      %p30 = scmp.ge.s32.totalorder %s29, 2
      %s31 = scalar_select %p30, 0, %s29
      %s32 = sadd.s32 1, %s23
      %s33 = scalar_select %p30, %s32, %s23
      %p34 = scmp.ge.s32.totalorder %s33, 2
      %s35 = scalar_select %p34, 0, %s33
      %s36 = ssub.s32 %s23, %s35
      %s37 = ssub.s32 %s24, %s31
      %s38 = sor.u32 %s36, %s37
      %p39 = scmp.eq.s32.totalorder %s38, 0
      %s41 = sadd.s32 %s40, 1
      %s42 = scalar_select %p39, %s40, %s41
      %p45 = pneg %p39
      %p46 = scmp.eq.s32.totalorder %s16, 3
      %p47 = por %p45, %p46
      %p48 = scmp.ne.s32.totalorder %s40, %s43
      %p49 = scmp.eq.s32.totalorder %s16, 0
      %p50 = por %p48, %p49
      %p51 = scmp.ne.s32.totalorder %s40, %s43
      %p52 = scmp.eq.s32.totalorder %s21, 3
      %p53 = por %p51, %p52
      %p54 = scmp.ne.s32.totalorder %s43, %s44
      %p55 = scmp.eq.s32.totalorder %s21, 0
      %p56 = por %p54, %p55
      %p57 = scmp.ne.s32.totalorder %s43, %s44
      %p58 = scmp.eq.s32.totalorder %s22, 3
      %p59 = por %p57, %p58
      %p61 = scmp.ne.s32.totalorder %s44, %s60
      %p62 = scmp.eq.s32.totalorder %s22, 0
      %p63 = por %p61, %p62
      %s64 = smul.u32 %s24, 2
      %s65 = ssub.s32 %s64, 1
      %p66 = scmp.gt.s32.totalorder %s65, 0
      %s67 = scalar_select %p66, %s65, 0
      %s68 = smul.u32 %s31, 2
      %s69 = ssub.s32 %s68, 1
      %p70 = scmp.gt.s32.totalorder %s69, 0
      %s71 = scalar_select %p70, %s69, 0
      %s72 = ssub.s32 %s23, %s35
      %s73 = ssub.s32 %s67, %s71
      %s74 = sor.u32 %s72, %s73
      %p75 = scmp.eq.s32.totalorder %s74, 0
      %s77 = sadd.s32 %s76, 1
      %s78 = scalar_select %p75, %s76, %s77
      %p81 = pneg %p75
      %p82 = scmp.eq.s32.totalorder %s16, 3
      %p83 = por %p81, %p82
      %p84 = scmp.ne.s32.totalorder %s76, %s79
      %p85 = scmp.eq.s32.totalorder %s16, 0
      %p86 = por %p84, %p85
      %p87 = scmp.ne.s32.totalorder %s76, %s79
      %p88 = scmp.eq.s32.totalorder %s21, 3
      %p89 = por %p87, %p88
      %p90 = scmp.ne.s32.totalorder %s79, %s80
      %p91 = scmp.eq.s32.totalorder %s21, 0
      %p92 = por %p90, %p91
      %p93 = scmp.ne.s32.totalorder %s79, %s80
      %p94 = scmp.eq.s32.totalorder %s22, 3
      %p95 = por %p93, %p94
      %p97 = scmp.ne.s32.totalorder %s80, %s96
      %p98 = scmp.eq.s32.totalorder %s22, 0
      %p99 = por %p97, %p98
      %s100 = smul.u32 %s24, 2
      %s101 = sadd.s32 %s100, 2
      %p102 = scmp.lt.s32.totalorder %s101, 3
      %s103 = scalar_select %p102, %s101, 3
      %s104 = smul.u32 %s31, 2
      %s105 = sadd.s32 %s104, 2
      %p106 = scmp.lt.s32.totalorder %s105, 3
      %s107 = scalar_select %p106, %s105, 3
      %s108 = ssub.s32 %s23, %s35
      %s109 = ssub.s32 %s103, %s107
      %s110 = sor.u32 %s108, %s109
      %p111 = scmp.eq.s32.totalorder %s110, 0
      %s113 = sadd.s32 %s112, 1
      %s114 = scalar_select %p111, %s112, %s113
      %p117 = pneg %p111
      %p118 = scmp.eq.s32.totalorder %s16, 3
      %p119 = por %p117, %p118
      %p120 = scmp.ne.s32.totalorder %s112, %s115
      %p121 = scmp.eq.s32.totalorder %s16, 0
      %p122 = por %p120, %p121
      %p123 = scmp.ne.s32.totalorder %s112, %s115
      %p124 = scmp.eq.s32.totalorder %s21, 3
      %p125 = por %p123, %p124
      %p126 = scmp.ne.s32.totalorder %s115, %s116
      %p127 = scmp.eq.s32.totalorder %s21, 0
      %p128 = por %p126, %p127
      %p129 = scmp.ne.s32.totalorder %s115, %s116
      %p130 = scmp.eq.s32.totalorder %s22, 3
      %p131 = por %p129, %p130
      %p133 = scmp.ne.s32.totalorder %s116, %s132
      %p134 = scmp.eq.s32.totalorder %s22, 0
      %p135 = por %p133, %p134
      %s137 = sadd.s32 %s136, 1
      %p140 = scmp.eq.s32.totalorder %s16, 3
      %p141 = scmp.ne.s32.totalorder %s136, %s138
      %p142 = scmp.eq.s32.totalorder %s16, 0
      %p143 = por %p141, %p142
      %p144 = scmp.ne.s32.totalorder %s136, %s138
      %p145 = scmp.eq.s32.totalorder %s21, 3
      %p146 = por %p144, %p145
      %p147 = scmp.ne.s32.totalorder %s138, %s139
      %p148 = scmp.eq.s32.totalorder %s21, 0
      %p149 = por %p147, %p148
      %p150 = scmp.ne.s32.totalorder %s138, %s139
      %p151 = scmp.eq.s32.totalorder %s22, 3
      %p152 = por %p150, %p151
      %p154 = scmp.ne.s32.totalorder %s139, %s153
      %p155 = scmp.eq.s32.totalorder %s22, 0
      %p156 = por %p154, %p155
      %s158 = sadd.s32 %s157, 1
      %p161 = scmp.eq.s32.totalorder %s16, 3
      %p162 = scmp.ne.s32.totalorder %s157, %s159
      %p163 = scmp.eq.s32.totalorder %s16, 0
      %p164 = por %p162, %p163
      %p165 = scmp.ne.s32.totalorder %s157, %s159
      %p166 = scmp.eq.s32.totalorder %s21, 3
      %p167 = por %p165, %p166
      %p168 = scmp.ne.s32.totalorder %s159, %s160
      %p169 = scmp.eq.s32.totalorder %s21, 0
      %p170 = por %p168, %p169
      %p171 = scmp.ne.s32.totalorder %s159, %s160
      %p172 = scmp.eq.s32.totalorder %s22, 3
      %p173 = por %p171, %p172
      %p175 = scmp.ne.s32.totalorder %s160, %s174
      %p176 = scmp.eq.s32.totalorder %s22, 0
      %p177 = por %p175, %p176
      %s179 = sadd.s32 %s178, 1
      %p182 = scmp.eq.s32.totalorder %s16, 3
      %p183 = scmp.ne.s32.totalorder %s178, %s180
      %p184 = scmp.eq.s32.totalorder %s16, 0
      %p185 = por %p183, %p184
      %p186 = scmp.ne.s32.totalorder %s178, %s180
      %p187 = scmp.eq.s32.totalorder %s21, 3
      %p188 = por %p186, %p187
      %p189 = scmp.ne.s32.totalorder %s180, %s181
      %p190 = scmp.eq.s32.totalorder %s21, 0
      %p191 = por %p189, %p190
      %p192 = scmp.ne.s32.totalorder %s180, %s181
      %p193 = scmp.eq.s32.totalorder %s22, 3
      %p194 = por %p192, %p193
      %p196 = scmp.ne.s32.totalorder %s181, %s195
      %p197 = scmp.eq.s32.totalorder %s22, 0
      %p198 = por %p196, %p197
      %s200 = sadd.s32 %s199, 1
      %p203 = scmp.eq.s32.totalorder %s16, 3
      %p204 = scmp.ne.s32.totalorder %s199, %s201
      %p205 = scmp.eq.s32.totalorder %s16, 0
      %p206 = por %p204, %p205
      %p207 = scmp.ne.s32.totalorder %s199, %s201
      %p208 = scmp.eq.s32.totalorder %s21, 3
      %p209 = por %p207, %p208
      %p210 = scmp.ne.s32.totalorder %s201, %s202
      %p211 = scmp.eq.s32.totalorder %s21, 0
      %p212 = por %p210, %p211
      %p213 = scmp.ne.s32.totalorder %s201, %s202
      %p214 = scmp.eq.s32.totalorder %s22, 3
      %p215 = por %p213, %p214
      %p217 = scmp.ne.s32.totalorder %s202, %s216
      %p218 = scmp.eq.s32.totalorder %s22, 0
      %p219 = por %p217, %p218
      %s220 = ssub.s32 %s23, %s35
      %s221 = ssub.s32 %s24, %s31
      %s222 = sor.u32 %s220, %s221
      %p223 = scmp.eq.s32.totalorder %s222, 0
      %s225 = sadd.s32 %s224, 1
      %s226 = scalar_select %p223, %s224, %s225
      %p229 = pneg %p223
      %p230 = scmp.eq.s32.totalorder %s16, 3
      %p231 = por %p229, %p230
      %p232 = scmp.ne.s32.totalorder %s224, %s227
      %p233 = scmp.eq.s32.totalorder %s16, 0
      %p234 = por %p232, %p233
      %p235 = scmp.ne.s32.totalorder %s224, %s227
      %p236 = scmp.eq.s32.totalorder %s21, 3
      %p237 = por %p235, %p236
      %p238 = scmp.ne.s32.totalorder %s227, %s228
      %p239 = scmp.eq.s32.totalorder %s21, 0
      %p240 = por %p238, %p239
      %p241 = scmp.ne.s32.totalorder %s227, %s228
      %p242 = scmp.eq.s32.totalorder %s22, 3
      %p243 = por %p241, %p242
      %p245 = scmp.ne.s32.totalorder %s228, %s244
      %p246 = scmp.eq.s32.totalorder %s22, 0
      %p247 = por %p245, %p246
      %p248 = scmp.le.s32.totalorder 1, %s16
      %p249 = scmp.lt.s32.totalorder %s16, 5
      %p250 = pnand %p248, %p249
      %p251 = pneg %p250
      // Predicated region
      $region9: #{_patch_embed_impl.3} parent=5 // pred_check
        _
      $region10: #{_patch_embed_impl.3} parent=5 // pred_check_branch
        %253 = sbr.rel (%p250) target = $region12
      $region11: #{_patch_embed_impl.3} parent=5 // pred_region
        %s254 = ssub.s32 %s16, 1
        // Predicated region
        $region13: #{_patch_embed_impl.3} parent=11 // pred_check
          %p255 = pneg %p149
        $region14: #{_patch_embed_impl.3} parent=11 // pred_check_branch
          %257 = sbr.rel (%p255) target = $region16
        $region15: #{_patch_embed_impl.3} parent=11 // pred_region
          _
        $region16: #{_patch_embed_impl.3} parent=11 // pred_fallthru
          _
        // Predicated region
        $region17: #{_patch_embed_impl.3} parent=11 // pred_check
          %p258 = pneg %p170
        $region18: #{_patch_embed_impl.3} parent=11 // pred_check_branch
          %260 = sbr.rel (%p258) target = $region20
        $region19: #{_patch_embed_impl.3} parent=11 // pred_region
          _
        $region20: #{_patch_embed_impl.3} parent=11 // pred_fallthru
          _
        // Predicated region
        $region21: #{_patch_embed_impl.3} parent=11 // pred_check
          %p261 = pneg %p191
        $region22: #{_patch_embed_impl.3} parent=11 // pred_check_branch
          %263 = sbr.rel (%p261) target = $region24
        $region23: #{_patch_embed_impl.3} parent=11 // pred_region
          _
        $region24: #{_patch_embed_impl.3} parent=11 // pred_fallthru
          _
        // Predicated region
        $region25: #{_patch_embed_impl.3} parent=11 // pred_check
          %p264 = pneg %p212
        $region26: #{_patch_embed_impl.3} parent=11 // pred_check_branch
          %266 = sbr.rel (%p264) target = $region28
        $region27: #{_patch_embed_impl.3} parent=11 // pred_region
          _
        $region28: #{_patch_embed_impl.3} parent=11 // pred_fallthru
          _
      $region12: #{_patch_embed_impl.3} parent=5 // pred_fallthru
        _
      %p267 = scmp.lt.s32.totalorder %s16, 4
      // Predicated region
      $region29: #{_patch_embed_impl.3} parent=5 // pred_check
        %p268 = pneg %p267
      $region30: #{_patch_embed_impl.3} parent=5 // pred_check_branch
        %270 = sbr.rel (%p268) target = $region32
      $region31: #{_patch_embed_impl.3} parent=5 // pred_region
        // Predicated region
        $region33: #{_patch_embed_impl.3} parent=31 // pred_check
          %p271 = pneg %p50
        $region34: #{_patch_embed_impl.3} parent=31 // pred_check_branch
          %273 = sbr.rel (%p271) target = $region36
        $region35: #{_patch_embed_impl.3} parent=31 // pred_region
          %s274 = smul.u32 2, %s24
          %p275 = scmp.lt.s32.totalorder %s23, 1
          %s276 = scalar_select %p275, %s23, 1
          %p277 = scmp.lt.s32.totalorder %s274, 3
          %s278 = scalar_select %p277, %s274, 3
          %s279 = smul.addr %s276, 4
          %s280 = sadd.s32 %s278, %s279
          %s281 = smul.addr %s280, 2
          %s282 = scalar_lea.vmem %s0, %s281
          %s283 = smul.u32 2, %s24
        $region36: #{_patch_embed_impl.3} parent=31 // pred_fallthru
          _
        // Predicated region
        $region37: #{_patch_embed_impl.3} parent=31 // pred_check
          %p284 = pneg %p86
        $region38: #{_patch_embed_impl.3} parent=31 // pred_check_branch
          %286 = sbr.rel (%p284) target = $region40
        $region39: #{_patch_embed_impl.3} parent=31 // pred_region
          %s287 = smul.u32 %s24, 2
          %s288 = ssub.s32 %s287, 1
          %p289 = scmp.gt.s32.totalorder %s288, 0
          %s290 = scalar_select %p289, %s288, 0
          %p291 = scmp.lt.s32.totalorder %s23, 1
          %s292 = scalar_select %p291, %s23, 1
          %p293 = scmp.lt.s32.totalorder %s290, 3
          %s294 = scalar_select %p293, %s290, 3
          %s295 = smul.addr %s292, 4
          %s296 = sadd.s32 %s294, %s295
          %s297 = smul.addr %s296, 2
          %s298 = scalar_lea.vmem %s1, %s297
          %s299 = smul.u32 %s24, 2
          %s300 = ssub.s32 %s299, 1
          %p301 = scmp.gt.s32.totalorder %s300, 0
          %s302 = scalar_select %p301, %s300, 0
        $region40: #{_patch_embed_impl.3} parent=31 // pred_fallthru
          _
        // Predicated region
        $region41: #{_patch_embed_impl.3} parent=31 // pred_check
          %p303 = pneg %p122
        $region42: #{_patch_embed_impl.3} parent=31 // pred_check_branch
          %305 = sbr.rel (%p303) target = $region44
        $region43: #{_patch_embed_impl.3} parent=31 // pred_region
          %s306 = smul.u32 %s24, 2
          %s307 = sadd.s32 %s306, 2
          %p308 = scmp.lt.s32.totalorder %s307, 3
          %s309 = scalar_select %p308, %s307, 3
          %p310 = scmp.lt.s32.totalorder %s23, 1
          %s311 = scalar_select %p310, %s23, 1
          %p312 = scmp.lt.s32.totalorder %s309, 3
          %s313 = scalar_select %p312, %s309, 3
          %s314 = smul.addr %s311, 4
          %s315 = sadd.s32 %s313, %s314
          %s316 = smul.addr %s315, 2
          %s317 = scalar_lea.vmem %s2, %s316
          %s318 = smul.u32 %s24, 2
          %s319 = sadd.s32 %s318, 2
          %p320 = scmp.lt.s32.totalorder %s319, 3
          %s321 = scalar_select %p320, %s319, 3
        $region44: #{_patch_embed_impl.3} parent=31 // pred_fallthru
          _
      $region32: #{_patch_embed_impl.3} parent=5 // pred_fallthru
        _
      %p322 = scmp.le.s32.totalorder 1, %s16
      %p323 = scmp.lt.s32.totalorder %s16, 5
      %p324 = pnand %p322, %p323
      %p325 = pneg %p324
      // Predicated region
      $region45: #{_patch_embed_impl.3} parent=5 // pred_check
        _
      $region46: #{_patch_embed_impl.3} parent=5 // pred_check_branch
        %327 = sbr.rel (%p324) target = $region48
      $region47: #{_patch_embed_impl.3} parent=5 // pred_region
        %s328 = ssub.s32 %s16, 1
        %s329 = smul.u32 2, %s26
        %p330 = scmp.lt.s32.totalorder %s25, 1
        %s331 = scalar_select %p330, %s25, 1
        %p332 = scmp.lt.s32.totalorder %s329, 3
        %s333 = scalar_select %p332, %s329, 3
        %s334 = smul.addr %s331, 4
        %s335 = sadd.s32 %s333, %s334
        %s336 = smul.addr %s335, 2
        %s337 = scalar_lea.vmem %s0, %s336
        %p338 = pneg %p56
        %p339 = pneg %p53
        %s340 = smul.u32 %s26, 2
        %s341 = ssub.s32 %s340, 1
        %p342 = scmp.gt.s32.totalorder %s341, 0
        %s343 = scalar_select %p342, %s341, 0
        %p344 = scmp.lt.s32.totalorder %s25, 1
        %s345 = scalar_select %p344, %s25, 1
        %p346 = scmp.lt.s32.totalorder %s343, 3
        %s347 = scalar_select %p346, %s343, 3
        %s348 = smul.addr %s345, 4
        %s349 = sadd.s32 %s347, %s348
        %s350 = smul.addr %s349, 2
        %s351 = scalar_lea.vmem %s1, %s350
        %p352 = pneg %p92
        %p353 = pneg %p89
        %s354 = smul.u32 %s26, 2
        %s355 = sadd.s32 %s354, 2
        %p356 = scmp.lt.s32.totalorder %s355, 3
        %s357 = scalar_select %p356, %s355, 3
        %p358 = scmp.lt.s32.totalorder %s25, 1
        %s359 = scalar_select %p358, %s25, 1
        %p360 = scmp.lt.s32.totalorder %s357, 3
        %s361 = scalar_select %p360, %s357, 3
        %s362 = smul.addr %s359, 4
        %s363 = sadd.s32 %s361, %s362
        %s364 = smul.addr %s363, 2
        %s365 = scalar_lea.vmem %s2, %s364
        %p366 = pneg %p128
        %p367 = pneg %p125
        %p368 = pneg %p149
        %p369 = pneg %p146
        %p370 = pneg %p170
        %p371 = pneg %p167
        %p372 = pneg %p191
        %p373 = pneg %p188
        %p374 = pneg %p212
        %p375 = pneg %p209
        %p376 = pneg %p240
        %p377 = pneg %p237
        %s378 = sand.u32 %s227, 1
        %s379 = scalar_lea.sflag [#allocation3], %s378
        %s380 = sand.u32 %s227, 1
        %s381 = smul.addr %s380, 8
        %s382 = scalar_lea.vmem [#allocation2], %s381
        %s383 = smul.u32 2, %s26
        %p384 = scmp.lt.s32.totalorder %s25, 1
        %s385 = scalar_select %p384, %s25, 1
        %p386 = scmp.lt.s32.totalorder %s383, 3
        %s387 = scalar_select %p386, %s383, 3
        %s388 = smul.addr %s385, 4
        %s389 = sadd.s32 %s387, %s388
        %s390 = smul.addr %s389, 2
        %s391 = scalar_lea.vmem %s0, %s390
        %s392 = smul.u32 2, %s26
        %s393 = smul.u32 %s26, 2
        %s394 = ssub.s32 %s393, 1
        %p395 = scmp.gt.s32.totalorder %s394, 0
        %s396 = scalar_select %p395, %s394, 0
        %p397 = scmp.lt.s32.totalorder %s25, 1
        %s398 = scalar_select %p397, %s25, 1
        %p399 = scmp.lt.s32.totalorder %s396, 3
        %s400 = scalar_select %p399, %s396, 3
        %s401 = smul.addr %s398, 4
        %s402 = sadd.s32 %s400, %s401
        %s403 = smul.addr %s402, 2
        %s404 = scalar_lea.vmem %s1, %s403
        %s405 = smul.u32 %s26, 2
        %s406 = ssub.s32 %s405, 1
        %p407 = scmp.gt.s32.totalorder %s406, 0
        %s408 = scalar_select %p407, %s406, 0
        %s409 = smul.u32 %s26, 2
        %s410 = sadd.s32 %s409, 2
        %p411 = scmp.lt.s32.totalorder %s410, 3
        %s412 = scalar_select %p411, %s410, 3
        %p413 = scmp.lt.s32.totalorder %s25, 1
        %s414 = scalar_select %p413, %s25, 1
        %p415 = scmp.lt.s32.totalorder %s412, 3
        %s416 = scalar_select %p415, %s412, 3
        %s417 = smul.addr %s414, 4
        %s418 = sadd.s32 %s416, %s417
        %s419 = smul.addr %s418, 2
        %s420 = scalar_lea.vmem %s2, %s419
        %s421 = smul.u32 %s26, 2
        %s422 = sadd.s32 %s421, 2
        %p423 = scmp.lt.s32.totalorder %s422, 3
        %s424 = scalar_select %p423, %s422, 3
        %s425 = smul.u32 2, %s26
        %v428 = vld [vmem:[%s391] sm:$0x3]
        %v429 = vld [vmem:[%s391 + $0x2] sm:$0x3]
        %p430 = scmp.eq.s32.totalorder %s26, 0
        %v431 = vld [vmem:[%s404] sm:$0x3]
        %s432 = scalar_select %p430, 1, 0
        %v433 = vstv %s432
        %vm434 = vcmp.eq.s32.totalorder %v433, 1
        %v435 = vsel %vm434, 1, 0
        %v436 = vpack.c.b16 %v435, %v435
        %vm437 = vcmp.ne.s16.totalorder %v436, 0
        %v438 = vsel %vm437, 0, %v431
        %p439 = scmp.eq.s32.totalorder %s26, 1
        %v440 = vld [vmem:[%s420] sm:$0x3]
        %s441 = scalar_select %p439, 1, 0
        %v442 = vstv %s441
        %vm443 = vcmp.eq.s32.totalorder %v442, 1
        %v444 = vsel %vm443, 1, 0
        %v445 = vpack.c.b16 %v444, %v444
        %vm446 = vcmp.ne.s16.totalorder %v445, 0
        %v447 = vsel %vm446, 0, %v440
        %v453 = vunpack.c.l.s4 1983009808
        %v454 = vunpack.c.0.s8 %v453
        %v455 = vlaneseq
        %v456 = vshrl.u32 %v455, 7
        %v457 = vsub.s32 %v454, %v456
        %v458 = vrot.slane %v438, %v457
        %v460 = vunpack.c.l.s4 1983009808
        %v461 = vunpack.c.0.s8 %v460
        %v462 = vlaneseq
        %v463 = vshrl.u32 %v462, 7
        %v464 = vsub.s32 %v461, %v463
        %v465 = vrot.slane %v428, %v464
        %v467 = vunpack.c.l.s4 1983009808
        %v468 = vunpack.c.0.s8 %v467
        %v469 = vlaneseq
        %v470 = vshrl.u32 %v469, 7
        %v471 = vsub.s32 %v468, %v470
        %v472 = vrot.slane %v429, %v471
        %v474 = vunpack.c.l.s4 1983009808
        %v475 = vunpack.c.0.s8 %v474
        %v476 = vlaneseq
        %v477 = vshrl.u32 %v476, 7
        %v478 = vsub.s32 %v475, %v477
        %v479 = vrot.slane %v447, %v478
        %v481 = vshrl.u32 %v458, 16
        %v483 = vrot.slane %v481, 7
        %v484 = vshll.u32 %v458, 16
        %v486 = vor.u32 %v483, %v484
        %v488 = vshrl.u32 %v465, 16
        %v490 = vrot.slane %v488, 7
        %v491 = vshll.u32 %v465, 16
        %v493 = vor.u32 %v490, %v491
        %v495 = vshrl.u32 %v472, 16
        %v497 = vrot.slane %v495, 7
        %v498 = vshll.u32 %v472, 16
        %v500 = vor.u32 %v497, %v498
        %v502 = vshrl.u32 %v479, 16
        %v504 = vrot.slane %v502, 7
        %v505 = vshll.u32 %v479, 16
        %v507 = vor.u32 %v504, %v505
        %vm512 = vcmask 1040384
        %vm513 = vsmask.f32 256
        %vm514 = vmand %vm512, %vm513
        %v515 = vsel %vm514, 0, %v486
        %v516 = vsel %vm514, 0, %v493
        %v517 = vsel %vm514, 0, %v500
        %v518 = vsel %vm514, 0, %v507
        %v519 = vrot.slane %v484, 1
        %v520 = vor.u32 %v481, %v519
        %v521 = vrot.slane %v491, 1
        %v522 = vor.u32 %v488, %v521
        %v523 = vrot.slane %v498, 1
        %v524 = vor.u32 %v495, %v523
        %v525 = vrot.slane %v505, 1
        %v526 = vor.u32 %v502, %v525
        %vm531 = vcmask 1041408
        %vm532 = vsmask.f32 1280
        %vm533 = vmand %vm531, %vm532
        %v534 = vsel %vm533, %v520, 0
        %v535 = vsel %vm533, %v522, 0
        %v536 = vsel %vm533, %v524, 0
        %v537 = vsel %vm533, %v526, 0
        %v538 = vld [vmem:[%s3] sm:$0xf]
        %v539 = vld [vmem:[%s3 + $0x4] sm:$0x1]
        %v541 = vpack.i.b16 %v538, %v538
        %v543 = vlaneseq
        %v544 = vshrl.u32 %v543, 7
        %v545 = vsub.s32 0, %v544
        %v546 = vrot.slane %v541, %v545
        %v547 = vmul.bf16 %v546, %v515
        %v548 = vmul.bf16 %v546, %v516
        %v549 = vshrl.u32 %v538, 16
        %v550 = vpack.i.b16 %v549, %v549
        %v552 = vlaneseq
        %v553 = vshrl.u32 %v552, 7
        %v554 = vsub.s32 0, %v553
        %v555 = vrot.slane %v550, %v554
        %v556 = vmul.bf16 %v555, %v438
        %v557 = vmul.bf16 %v555, %v428
        %v558 = vadd.bf16 %v547, %v556
        %v559 = vadd.bf16 %v548, %v557
        %v560 = vlaneseq
        %v561 = vshrl.u32 %v560, 7
        %v562 = vsub.s32 1, %v561
        %v563 = vrot.slane %v541, %v562
        %v564 = vmul.bf16 %v563, %v534
        %v565 = vmul.bf16 %v563, %v535
        %v566 = vadd.bf16 %v558, %v564
        %v567 = vadd.bf16 %v559, %v565
        %v568 = vunpack.c.l.bf16 %v566
        %v569 = vunpack.c.l.bf16 %v567
        %v570 = vlaneseq
        %v571 = vshrl.u32 %v570, 7
        %v572 = vsub.s32 1, %v571
        %v573 = vrot.slane %v550, %v572
        %v574 = vmul.bf16 %v573, %v516
        %v575 = vmul.bf16 %v573, %v517
        %v576 = vlaneseq
        %v577 = vshrl.u32 %v576, 7
        %v578 = vsub.s32 2, %v577
        %v579 = vrot.slane %v541, %v578
        %v580 = vmul.bf16 %v579, %v428
        %v581 = vmul.bf16 %v579, %v429
        %v582 = vadd.bf16 %v574, %v580
        %v583 = vadd.bf16 %v575, %v581
        %v584 = vlaneseq
        %v585 = vshrl.u32 %v584, 7
        %v586 = vsub.s32 2, %v585
        %v587 = vrot.slane %v550, %v586
        %v588 = vmul.bf16 %v587, %v535
        %v589 = vmul.bf16 %v587, %v536
        %v590 = vadd.bf16 %v582, %v588
        %v591 = vadd.bf16 %v583, %v589
        %v592 = vunpack.c.l.bf16 %v590
        %v593 = vunpack.c.l.bf16 %v591
        %v594 = vadd.f32 %v568, %v592
        %v595 = vadd.f32 %v569, %v593
        %v596 = vlaneseq
        %v597 = vshrl.u32 %v596, 7
        %v598 = vsub.s32 3, %v597
        %v599 = vrot.slane %v541, %v598
        %v600 = vmul.bf16 %v599, %v517
        %v601 = vmul.bf16 %v599, %v518
        %v602 = vlaneseq
        %v603 = vshrl.u32 %v602, 7
        %v604 = vsub.s32 3, %v603
        %v605 = vrot.slane %v550, %v604
        %v606 = vmul.bf16 %v605, %v429
        %v607 = vmul.bf16 %v605, %v447
        %v608 = vadd.bf16 %v600, %v606
        %v609 = vadd.bf16 %v601, %v607
        %v611 = vpack.i.b16 %v539, %v539
        %v613 = vlaneseq
        %v614 = vshrl.u32 %v613, 7
        %v615 = vsub.s32 0, %v614
        %v616 = vrot.slane %v611, %v615
        %v617 = vmul.bf16 %v616, %v536
        %v618 = vmul.bf16 %v616, %v537
        %v619 = vadd.bf16 %v608, %v617
        %v620 = vadd.bf16 %v609, %v618
        %v621 = vunpack.c.l.bf16 %v619
        %v622 = vunpack.c.l.bf16 %v620
        %v623 = vadd.f32 %v594, %v621
        %v624 = vadd.f32 %v595, %v622
        %v625 = vld [vmem:[%s4] sm:$0x1]
        %v627 = vlaneseq
        %v628 = vshrl.u32 %v627, 7
        %v629 = vsub.s32 0, %v628
        %v630 = vrot.slane %v625, %v629
        %v632 = vadd.f32 %v623, %v630
        %v633 = vadd.f32 %v624, %v630
        %v634 = vunpack.c.l.bf16 %v428
        %v635 = vunpack.c.l.bf16 %v429
        %v636 = vxor.u32 %v632, 2147483648
        %v637 = vxor.u32 %v633, 2147483648
        %v638 = vmul.f32 %v636, 1.442695
        %v639 = vpow.pop %v638
        %v640 = vmul.f32 %v637, 1.442695
        %v641 = vpow.pop %v640
        %v642 = vadd.f32 %v639, 1.0
        %v643 = vadd.f32 %v641, 1.0
        %v644 = vrcp.pop %v642
        %v645 = vmul.f32 1.0, %v644
        %v646 = vrcp.pop %v643
        %v647 = vmul.f32 1.0, %v646
        %v648 = vmul.f32 %v634, %v645
        %v649 = vmul.f32 %v635, %v647
        %vm650 = vcmask 1043456
        %v651 = vsel %vm650, %v648, 0.0
        %652 = vadd.xlane.f32.xlu0 %v651
        %v653 = vpop.xlane.xlu0 %652
        %v654 = vsel %vm650, %v649, 0.0
        %655 = vadd.xlane.f32.xlu0 %v654
        %v656 = vpop.xlane.xlu0 %655
        %v657 = vmul.f32 %v648, %v648
        %v658 = vmul.f32 %v649, %v649
        %v659 = vsel %vm650, %v657, 0.0
        %660 = vadd.xlane.f32.xlu0 %v659
        %v661 = vpop.xlane.xlu0 %660
        %v662 = vsel %vm650, %v658, 0.0
        %663 = vadd.xlane.f32.xlu0 %v662
        %v664 = vpop.xlane.xlu0 %663
        %v665 = vmul.f32 %v653, 0.03125
        %v666 = vmul.f32 %v656, 0.03125
        %v667 = vmul.f32 %v661, 0.03125
        %v668 = vmul.f32 %v664, 0.03125
        %v669 = vmul.f32 %v665, %v665
        %v670 = vmul.f32 %v666, %v666
        %v671 = vsub.f32 %v667, %v669
        %v672 = vsub.f32 %v668, %v670
        %v673 = vsub.f32 %v648, %v665
        %v674 = vsub.f32 %v649, %v666
        %v675 = vadd.f32 %v671, 1e-05
        %v676 = vadd.f32 %v672, 1e-05
        %v677 = vrsqrt.pop %v675
        %v678 = vrsqrt.pop %v676
        %v679 = vmul.f32 %v673, %v677
        %v680 = vmul.f32 %v674, %v678
        %v681 = vld [vmem:[%s5] sm:$0x1]
        %v683 = vlaneseq
        %v684 = vshrl.u32 %v683, 7
        %v685 = vsub.s32 0, %v684
        %v686 = vrot.slane %v681, %v685
        %v688 = vmul.f32 %v679, %v686
        %v689 = vmul.f32 %v680, %v686
        %v690 = vld [vmem:[%s6] sm:$0x1]
        %v692 = vlaneseq
        %v693 = vshrl.u32 %v692, 7
        %v694 = vsub.s32 0, %v693
        %v695 = vrot.slane %v690, %v694
        %v697 = vadd.f32 %v688, %v695
        %v698 = vadd.f32 %v689, %v695
        %vm699 = vcmask 257024
        %700 = vst.msk [vmem:[%s382] sm:$0xf] %vm699, %v697
        %701 = vst.msk [vmem:[%s382 + $0x4] sm:$0xf] %vm699, %v698
        %s702 = sand.u32 %s227, 1
        %s703 = scalar_lea.sflag [#allocation3], %s702
        %s704 = sand.u32 %s227, 1
        %s705 = smul.addr %s704, 8
        %s706 = scalar_lea.vmem [#allocation2], %s705
        // Predicated region
        $region49: #{_patch_embed_impl.3} parent=47 // pred_check
          %p707 = pneg %p237
        $region50: #{_patch_embed_impl.3} parent=47 // pred_check_branch
          %709 = sbr.rel (%p707) target = $region52
        $region51: #{_patch_embed_impl.3} parent=47 // pred_region
          %s710 = smul.u32 2, %s26
          %s712 = ssub.s32 128, 128
          %713 = vsyncadd %s703, %s712
          %s714 = smul.addr %s25, 4
          %s715 = sadd.s32 %s710, %s714
          %s716 = smul.addr %s715, 64
          %s717 = scalar_lea.hbm %s7, %s716
          %s718 = sshll.u32 %s706, 4
          %s719 = int_to_ptr.vmem [resolvable:$true] %s718
          %724 = dma.vmem_to_hbm [thread:$0]  %s719, 128, %s717, %s703, 64, 64, 4
        $region52: #{_patch_embed_impl.3} parent=47 // pred_fallthru
          _
      $region48: #{_patch_embed_impl.3} parent=5 // pred_fallthru
        _
      %p725 = scmp.le.s32.totalorder 2, %s16
      // Predicated region
      $region53: #{_patch_embed_impl.3} parent=5 // pred_check
        %p726 = pneg %p725
      $region54: #{_patch_embed_impl.3} parent=5 // pred_check_branch
        %728 = sbr.rel (%p726) target = $region56
      $region55: #{_patch_embed_impl.3} parent=5 // pred_region
        %s729 = ssub.s32 %s16, 2
        // Predicated region
        $region57: #{_patch_embed_impl.3} parent=55 // pred_check
          %p730 = pneg %p243
        $region58: #{_patch_embed_impl.3} parent=55 // pred_check_branch
          %732 = sbr.rel (%p730) target = $region60
        $region59: #{_patch_embed_impl.3} parent=55 // pred_region
          %s733 = sand.u32 %s228, 1
          %s734 = scalar_lea.sflag [#allocation3], %s733
          %s735 = sand.u32 %s228, 1
          %s736 = smul.addr %s735, 8
          %s737 = scalar_lea.vmem [#allocation2], %s736
          %738 = dma.done %s734, 128
        $region60: #{_patch_embed_impl.3} parent=55 // pred_fallthru
          _
      $region56: #{_patch_embed_impl.3} parent=5 // pred_fallthru
        _
    $region6: #{_patch_embed_impl.3} parent=1 // loop_footer
      %s20 = sadd.s32 1, %s16
    $region7: #{_patch_embed_impl.3} parent=1 // loop_footer_branch
      %15 = sbr.rel target = $region3
    $region8: #{_patch_embed_impl.3} parent=1 // loop_exit
      _
    %739 = vsyncpa [#allocation3], 1
    %s740 = scalar_lea.sflag [#allocation3], 1
    %741 = vsyncpa %s740, 1

</llo_original>
